<compile_context>
chip_gen: v7x
topology: tpu7x:2x2x1
jax: 0.10.0
libtpu: 0.0.40
codegen_flags: <defaults>
</compile_context>

<pallas_src>
import functools

import jax
import jax.numpy as jnp
from jax import lax
from jax.experimental import pallas as pl
from jax.experimental.pallas import tpu as pltpu


def _round_up(x, m):
    return (x + m - 1) // m * m


def _pick_time_chunk(T, max_tt=16):
    """Prefer the largest divisor of T <= max_tt; if only tiny divisors exist
    (prime/odd T), use max_tt and pad+mask the tail timesteps instead."""
    best = 1
    for cand in range(min(max_tt, T), 0, -1):
        if T % cand == 0:
            best = cand
            break
    if best >= max(4, min(max_tt, T) // 2):
        return best
    return min(max_tt, T)


def _sigmoid_fast(x):
    # sigmoid(x) == 0.5 * tanh(0.5 * x) + 0.5 : one EUP transcendental instead of
    # exp + reciprocal; algebraically identical to jax.nn.sigmoid.
    return 0.5 * jnp.tanh(0.5 * x) + 0.5


# ----------------------------------------------------------------------------
# Fused kernel: all LSTM layers + FC head
# ----------------------------------------------------------------------------
def _lstm_fused_kernel(x_ref, w_ref, b_ref, fcw_ref, fcb_ref, out_ref,
                       act_ref, pre_ref, h_ref, c_ref,
                       *, TT, H_pad, W_pad, T_real, mask_tail):
    """Grid = (num_layers, num_time_chunks), both sequential ("arbitrary").

    x_ref   : (TT, B_pad, W_pad)            padded input chunk (only used at l==0)
    w_ref   : (1, W_pad+H_pad, 4*H_pad)     [W_ih^T ; W_hh^T] of this layer (mxu dtype)
    b_ref   : (1, 1, 4*H_pad)               b_ih + b_hh of this layer (f32)
    fcw_ref : (H_pad, O_pad)                FC weight^T (mxu dtype)
    fcb_ref : (1, O_pad)                    FC bias (f32)
    out_ref : (B_pad, O_pad)                logits (resident; written once)
    act_ref : (T_pad, B_pad, W_pad) scratch activation sequence (overwritten per layer)
    pre_ref : (TT*B_pad, 4*H_pad) scratch   per-chunk hoisted input projection
    h_ref/c_ref : (B_pad, H_pad) scratch    recurrent carry
    """
    l = pl.program_id(0)
    tc = pl.program_id(1)
    last_layer = pl.num_programs(0) - 1
    last_chunk = pl.num_programs(1) - 1
    B_pad = x_ref.shape[1]

    base = pl.multiple_of(tc * TT, TT)

    # Layer 0: stage this time chunk of the padded input into the VMEM activation
    # buffer.  Deeper layers read the previous layer's hidden states from the
    # same buffer and overwrite them in place (no HBM round-trip between layers).
    @pl.when(l == 0)
    def _():
        act_ref[pl.ds(base, TT)] = x_ref[...].astype(act_ref.dtype)

    # Reset the recurrent carry at the start of every layer.
    @pl.when(tc == 0)
    def _():
        h_ref[...] = jnp.zeros_like(h_ref)
        c_ref[...] = jnp.zeros_like(c_ref)

    w_ih = w_ref[0, :W_pad, :]     # (W_pad, 4*H_pad)  input-to-gate weights
    w_hh = w_ref[0, W_pad:, :]     # (H_pad, 4*H_pad)  hidden-to-gate weights
    b = b_ref[0]                   # (1, 4*H_pad)      fused bias (f32)

    # Hoisted input projection: ONE big GEMM (+ bias) for the whole time chunk.
    # M = TT*B_pad rows keeps the MXU filled; the serial per-step matmul below
    # only has K = H_pad.  Activation columns [H, W_pad) hit all-zero weight
    # rows (see pack_params), so stale data there contributes nothing.
    act_chunk = act_ref[pl.ds(base, TT)]                        # (TT, B_pad, W_pad)
    xin = act_chunk.reshape(TT * B_pad, W_pad).astype(w_ih.dtype)
    pre_ref[...] = jnp.dot(xin, w_ih, preferred_element_type=jnp.float32) + b

    h = h_ref[...]
    c = c_ref[...]
    for tt in range(TT):            # static unroll; TT capped small (<= 16)
        pre = pre_ref[tt * B_pad:(tt + 1) * B_pad]              # (B_pad, 4*H_pad)
        gates = pre + jnp.dot(h.astype(w_hh.dtype), w_hh,
                              preferred_element_type=jnp.float32)
        i_g = _sigmoid_fast(gates[:, 0 * H_pad:1 * H_pad])
        f_g = _sigmoid_fast(gates[:, 1 * H_pad:2 * H_pad])
        g_g = jnp.tanh(gates[:, 2 * H_pad:3 * H_pad])
        o_g = _sigmoid_fast(gates[:, 3 * H_pad:4 * H_pad])
        c_new = f_g * c + i_g * g_g
        h_new = o_g * jnp.tanh(c_new)
        if mask_tail:
            # Padded tail timesteps (t >= T) must not advance the state.
            valid = (base + tt) < T_real
            c = jnp.where(valid, c_new, c)
            h = jnp.where(valid, h_new, h)
        else:
            c, h = c_new, h_new
        # Only the first H_pad (128-aligned) lanes are rewritten; remaining
        # stale lanes are multiplied by zero weight rows in the next layer.
        if W_pad == H_pad:
            act_ref[base + tt] = h
        else:
            act_ref[base + tt, :, 0:H_pad] = h
    h_ref[...] = h
    c_ref[...] = c

    # Last layer, last chunk: h == h_{T-1}; fused FC head, single output store.
    @pl.when(jnp.logical_and(l == last_layer, tc == last_chunk))
    def _():
        out_ref[...] = (
            jnp.dot(h.astype(fcw_ref.dtype), fcw_ref[...],
                    preferred_element_type=jnp.float32) + fcb_ref[...]
        ).astype(out_ref.dtype)


# ----------------------------------------------------------------------------
# Wrapper
# ----------------------------------------------------------------------------
def lstm_binary_classifier(x, params, *, mxu_dtype=jnp.bfloat16):
    """x: (B, T, input_dim) batch-first (like the PyTorch module). Returns (B, O)."""
    w_stack = params["w_stack"].astype(mxu_dtype)   # (L, W_pad + H_pad, 4*H_pad)
    b_stack = params["b_stack"]                     # (L, 1, 4*H_pad)  f32
    fc_w = params["fc_w_pad"].astype(mxu_dtype)     # (H_pad, O_pad)
    fc_b = params["fc_b_pad"]                       # (1, O_pad)       f32
    L, WH, H4 = w_stack.shape
    H_pad = H4 // 4
    W_pad = WH - H_pad
    O_pad = fc_w.shape[1]

    B, T, D = x.shape
    B_pad = _round_up(B, 8)
    TT = _pick_time_chunk(T)
    T_pad = _round_up(T, TT)
    NC = T_pad // TT
    mask_tail = (T_pad != T)

    # time-major; pad batch (sublanes), feature (lanes) and, if needed, time.
    x_tbd = jnp.transpose(x, (1, 0, 2)).astype(jnp.float32)       # (T, B, D)
    x_pad = jnp.zeros((T_pad, B_pad, W_pad), jnp.float32)
    x_pad = x_pad.at[:T, :B, :D].set(x_tbd)

    kernel = functools.partial(_lstm_fused_kernel, TT=TT, H_pad=H_pad,
                               W_pad=W_pad, T_real=T, mask_tail=mask_tail)

    out_pad = pl.pallas_call(
        kernel,
        out_shape=jax.ShapeDtypeStruct((B_pad, O_pad), jnp.float32),
        grid=(L, NC),
        in_specs=[
            # Input chunk: the block index is pinned for l > 0 so the input is
            # only DMA'd while layer 0 runs (not L times).
            pl.BlockSpec((TT, B_pad, W_pad),
                         lambda l, tc: (jnp.where(l == 0, tc, 0), 0, 0)),
            pl.BlockSpec((1, W_pad + H_pad, 4 * H_pad), lambda l, tc: (l, 0, 0)),
            pl.BlockSpec((1, 1, 4 * H_pad), lambda l, tc: (l, 0, 0)),
            pl.BlockSpec((H_pad, O_pad), lambda l, tc: (0, 0)),
            pl.BlockSpec((1, O_pad), lambda l, tc: (0, 0)),
        ],
        out_specs=pl.BlockSpec((B_pad, O_pad), lambda l, tc: (0, 0)),
        scratch_shapes=[
            pltpu.VMEM((T_pad, B_pad, W_pad), jnp.float32),    # activation sequence
            pltpu.VMEM((TT * B_pad, 4 * H_pad), jnp.float32),  # hoisted input proj
            pltpu.VMEM((B_pad, H_pad), jnp.float32),           # h carry
            pltpu.VMEM((B_pad, H_pad), jnp.float32),           # c carry
        ],
        compiler_params=pltpu.CompilerParams(
            dimension_semantics=("arbitrary", "arbitrary")),   # layer & time: sequential
    )(x_pad, w_stack, b_stack, fc_w, fc_b)

    return out_pad[:B, :params["output_dim"]]


# ----------------------------------------------------------------------------
# Parameter init (PyTorch-shaped) + packing into padded / fused kernel layout
# ----------------------------------------------------------------------------
def init_raw_params(key, input_dim, hidden_dim, layer_dim, output_dim=1):
    k = 1.0 / (hidden_dim ** 0.5)
    layers = []
    for l in range(layer_dim):
        d_in = input_dim if l == 0 else hidden_dim
        key, k1, k2, k3, k4 = jax.random.split(key, 5)
        layers.append(dict(
            wih=jax.random.uniform(k1, (4 * hidden_dim, d_in), jnp.float32, -k, k),
            whh=jax.random.uniform(k2, (4 * hidden_dim, hidden_dim), jnp.float32, -k, k),
            bih=jax.random.uniform(k3, (4 * hidden_dim,), jnp.float32, -k, k),
            bhh=jax.random.uniform(k4, (4 * hidden_dim,), jnp.float32, -k, k),
        ))
    key, k5, k6 = jax.random.split(key, 3)
    fc_w = jax.random.uniform(k5, (output_dim, hidden_dim), jnp.float32, -k, k)
    fc_b = jax.random.uniform(k6, (output_dim,), jnp.float32, -k, k)
    return dict(layers=layers, fc_w=fc_w, fc_b=fc_b,
                input_dim=input_dim, hidden_dim=hidden_dim, output_dim=output_dim)


def pack_params(raw):
    D = raw["input_dim"]
    H = raw["hidden_dim"]
    O = raw["output_dim"]
    L = len(raw["layers"])
    H_pad = _round_up(H, 128)
    D_pad = _round_up(D, 128)
    W_pad = max(D_pad, H_pad)          # shared padded input width for every layer
    O_pad = _round_up(O, 128)

    def pad_gate_cols(m):
        # m: (rows, 4H), PyTorch gate order i|f|g|o -> (rows, 4*H_pad) with each
        # gate's H columns at a 128-aligned H_pad slot (free vreg-view slices).
        rows = m.shape[0]
        out = jnp.zeros((rows, 4 * H_pad), jnp.float32)
        for g in range(4):
            out = out.at[:, g * H_pad:g * H_pad + H].set(m[:, g * H:(g + 1) * H])
        return out

    # NOTE: rows [d_in, W_pad) of every layer's W_ih block stay exactly zero;
    # the kernel relies on this so stale activation lanes contribute nothing.
    w_stack = jnp.zeros((L, W_pad + H_pad, 4 * H_pad), jnp.float32)
    b_stack = jnp.zeros((L, 1, 4 * H_pad), jnp.float32)
    for l, lyr in enumerate(raw["layers"]):
        d_in = D if l == 0 else H
        wih_t = pad_gate_cols(lyr["wih"].T)                       # (d_in, 4*H_pad)
        whh_t = pad_gate_cols(lyr["whh"].T)                       # (H, 4*H_pad)
        bias = pad_gate_cols((lyr["bih"] + lyr["bhh"]).reshape(1, -1))
        w_stack = w_stack.at[l, :d_in, :].set(wih_t)              # input rows
        w_stack = w_stack.at[l, W_pad:W_pad + H, :].set(whh_t)    # hidden rows
        b_stack = b_stack.at[l, 0, :].set(bias[0])

    fc_w_pad = jnp.zeros((H_pad, O_pad), jnp.float32).at[:H, :O].set(raw["fc_w"].T)
    fc_b_pad = jnp.zeros((1, O_pad), jnp.float32).at[0, :O].set(raw["fc_b"])
    return dict(w_stack=w_stack, b_stack=b_stack,
                fc_w_pad=fc_w_pad, fc_b_pad=fc_b_pad, output_dim=O)


# ----------------------------------------------------------------------------
# Pure-JAX reference (unpadded) for correctness
# ----------------------------------------------------------------------------
def reference_forward(x, raw):
    H = raw["hidden_dim"]
    h_seq = jnp.transpose(x, (1, 0, 2)).astype(jnp.float32)  # (T, B, D)
    B = h_seq.shape[1]
    for lyr in raw["layers"]:
        wih_t, whh_t = lyr["wih"].T, lyr["whh"].T
        b = (lyr["bih"] + lyr["bhh"]).reshape(1, -1)

        def step(carry, x_t, wih_t=wih_t, whh_t=whh_t, b=b):
            h, c = carry
            gates = x_t @ wih_t + h @ whh_t + b
            i = jax.nn.sigmoid(gates[:, 0:H])
            f = jax.nn.sigmoid(gates[:, H:2 * H])
            g = jnp.tanh(gates[:, 2 * H:3 * H])
            o = jax.nn.sigmoid(gates[:, 3 * H:4 * H])
            c = f * c + i * g
            h = o * jnp.tanh(c)
            return (h, c), h

        init = (jnp.zeros((B, H), jnp.float32), jnp.zeros((B, H), jnp.float32))
        _, h_seq = lax.scan(step, init, h_seq)
    return h_seq[-1] @ raw["fc_w"].T + raw["fc_b"]


# ----------------------------------------------------------------------------
if __name__ == "__main__":
    # Dropout between LSTM layers is train-mode only; eval forward == identity.
    B, T, INPUT_DIM, HIDDEN_DIM, LAYER_DIM, OUTPUT_DIM = 2, 8, 16, 32, 2, 1

    key = jax.random.PRNGKey(0)
    key, xk, pk = jax.random.split(key, 3)
    x = jax.random.normal(xk, (B, T, INPUT_DIM), jnp.float32)
    raw = init_raw_params(pk, INPUT_DIM, HIDDEN_DIM, LAYER_DIM, OUTPUT_DIM)
    params = pack_params(raw)

    ref = reference_forward(x, raw)

    # Perf-preferred path: bf16 MXU operands, f32 accumulation and f32 gate math.
    out = jax.block_until_ready(lstm_binary_classifier(x, params))
    assert out.shape == (B, OUTPUT_DIM), out.shape
    assert jnp.allclose(out, ref, atol=5e-2, rtol=5e-2), (out, ref)

    # Full-f32 MXU path matches the f32 reference tightly.
    out_f32 = jax.block_until_ready(
        lstm_binary_classifier(x, params, mxu_dtype=jnp.float32))
    assert jnp.allclose(out_f32, ref, atol=1e-4, rtol=1e-4), (out_f32, ref)

    print("KERNEL_OK")
</pallas_src>

<mosaic_0001>
module attributes {stable_mosaic.version = 11 : i64} {
  func.func @_lstm_fused_kernel(%arg0: i32, %arg1: i32, %arg2: memref<8x8x128xf32, #tpu.memory_space<vmem>>, %arg3: memref<1x256x512xbf16, #tpu.memory_space<vmem>>, %arg4: memref<1x1x512xf32, #tpu.memory_space<vmem>>, %arg5: memref<128x128xbf16, #tpu.memory_space<vmem>>, %arg6: memref<1x128xf32, #tpu.memory_space<vmem>>, %arg7: memref<8x128xf32, #tpu.memory_space<vmem>>, %arg8: memref<8x8x128xf32, #tpu.memory_space<vmem>>, %arg9: memref<64x512xf32, #tpu.memory_space<vmem>>, %arg10: memref<8x128xf32, #tpu.memory_space<vmem>>, %arg11: memref<8x128xf32, #tpu.memory_space<vmem>>) attributes {dimension_semantics = [#tpu.dimension_semantics<arbitrary>, #tpu.dimension_semantics<arbitrary>], iteration_bounds = array<i64: 2, 1>, scalar_prefetch = 0 : i64, scratch_operands = 4 : i64, tpu.core_type = #tpu.core_type<tc>, window_params = [{transform_indices = @transform_0, window_bounds = array<i64: 8, 8, 128>}, {transform_indices = @transform_1, window_bounds = array<i64: 1, 256, 512>}, {transform_indices = @transform_2, window_bounds = array<i64: 1, 1, 512>}, {pipeline_mode = #tpu.pipeline_mode<synchronous>, transform_indices = @transform_3, window_bounds = array<i64: 128, 128>}, {pipeline_mode = #tpu.pipeline_mode<synchronous>, transform_indices = @transform_4, window_bounds = array<i64: 1, 128>}, {pipeline_mode = #tpu.pipeline_mode<synchronous>, transform_indices = @transform_5, window_bounds = array<i64: 8, 128>}]} {
    %c8_i32 = arith.constant 8 : i32
    %0 = arith.muli %arg1, %c8_i32 : i32
    %1 = tpu.assume_multiple %0, 8 : i32
    %c0_i32 = arith.constant 0 : i32
    %2 = arith.cmpi eq, %arg0, %c0_i32 : i32
    %3 = arith.extui %2 : i1 to i32
    %c0_i32_0 = arith.constant 0 : i32
    %4 = arith.cmpi ne, %3, %c0_i32_0 : i32
    scf.if %4 {
      %c0_131 = arith.constant 0 : index
      %c0_132 = arith.constant 0 : index
      %c0_133 = arith.constant 0 : index
      %351 = vector.load %arg2[%c0_131, %c0_132, %c0_133] : memref<8x8x128xf32, #tpu.memory_space<vmem>>, vector<8x8x128xf32>
      %352 = arith.index_cast %1 : i32 to index
      %c0_134 = arith.constant 0 : index
      %c0_135 = arith.constant 0 : index
      %353 = vector.load %arg8[%352, %c0_134, %c0_135] : memref<8x8x128xf32, #tpu.memory_space<vmem>>, vector<8x8x128xf32>
      tpu.vector_store %arg8[%352, %c0_134, %c0_135], %351 {strides = array<i32>} : memref<8x8x128xf32, #tpu.memory_space<vmem>>, vector<8x8x128xf32>,
    } else {
    }
    %c0_i32_1 = arith.constant 0 : i32
    %5 = arith.cmpi eq, %arg1, %c0_i32_1 : i32
    %6 = arith.extui %5 : i1 to i32
    %c0_i32_2 = arith.constant 0 : i32
    %7 = arith.cmpi ne, %6, %c0_i32_2 : i32
    scf.if %7 {
      %cst_131 = arith.constant 0.000000e+00 : f32
      %351 = vector.broadcast %cst_131 : f32 to vector<8x128xf32>
      %c0_132 = arith.constant 0 : index
      %c0_133 = arith.constant 0 : index
      %352 = vector.load %arg10[%c0_132, %c0_133] : memref<8x128xf32, #tpu.memory_space<vmem>>, vector<8x128xf32>
      tpu.vector_store %arg10[%c0_132, %c0_133], %351 {strides = array<i32>} : memref<8x128xf32, #tpu.memory_space<vmem>>, vector<8x128xf32>,
      %cst_134 = arith.constant 0.000000e+00 : f32
      %353 = vector.broadcast %cst_134 : f32 to vector<8x128xf32>
      %c0_135 = arith.constant 0 : index
      %c0_136 = arith.constant 0 : index
      %354 = vector.load %arg11[%c0_135, %c0_136] : memref<8x128xf32, #tpu.memory_space<vmem>>, vector<8x128xf32>
      tpu.vector_store %arg11[%c0_135, %c0_136], %353 {strides = array<i32>} : memref<8x128xf32, #tpu.memory_space<vmem>>, vector<8x128xf32>,
    } else {
    }
    %c0 = arith.constant 0 : index
    %c0_3 = arith.constant 0 : index
    %c0_4 = arith.constant 0 : index
    %8 = vector.load %arg3[%c0, %c0_3, %c0_4] : memref<1x256x512xbf16, #tpu.memory_space<vmem>>, vector<1x128x512xbf16>
    %9 = vector.shape_cast %8 : vector<1x128x512xbf16> to vector<128x512xbf16>
    %c0_5 = arith.constant 0 : index
    %c128 = arith.constant 128 : index
    %c0_6 = arith.constant 0 : index
    %10 = vector.load %arg3[%c0_5, %c128, %c0_6] : memref<1x256x512xbf16, #tpu.memory_space<vmem>>, vector<1x128x512xbf16>
    %11 = vector.shape_cast %10 : vector<1x128x512xbf16> to vector<128x512xbf16>
    %c0_7 = arith.constant 0 : index
    %c0_8 = arith.constant 0 : index
    %c0_9 = arith.constant 0 : index
    %12 = vector.load %arg4[%c0_7, %c0_8, %c0_9] : memref<1x1x512xf32, #tpu.memory_space<vmem>>, vector<1x1x512xf32>
    %13 = vector.shape_cast %12 : vector<1x1x512xf32> to vector<1x512xf32>
    %14 = arith.index_cast %1 : i32 to index
    %c0_10 = arith.constant 0 : index
    %c0_11 = arith.constant 0 : index
    %15 = vector.load %arg8[%14, %c0_10, %c0_11] : memref<8x8x128xf32, #tpu.memory_space<vmem>>, vector<8x8x128xf32>
    %16 = vector.shape_cast %15 : vector<8x8x128xf32> to vector<64x128xf32>
    %17 = arith.truncf %16 : vector<64x128xf32> to vector<64x128xbf16>
    %cst = arith.constant dense<0.000000e+00> : vector<64x512xf32>
    %18 = tpu.matmul %17, %9, %cst {dimension_numbers = #tpu.dot_dimension_numbers<[1], [0], [0], [1], [0, 0, 1, 1], [], []>} : vector<64x128xbf16>, vector<128x512xbf16>, vector<64x512xf32> -> vector<64x512xf32>
    %19 = vector.broadcast %13 : vector<1x512xf32> to vector<64x512xf32>
    %20 = arith.addf %18, %19 : vector<64x512xf32>
    %c0_12 = arith.constant 0 : index
    %c0_13 = arith.constant 0 : index
    %21 = vector.load %arg9[%c0_12, %c0_13] : memref<64x512xf32, #tpu.memory_space<vmem>>, vector<64x512xf32>
    tpu.vector_store %arg9[%c0_12, %c0_13], %20 {strides = array<i32>} : memref<64x512xf32, #tpu.memory_space<vmem>>, vector<64x512xf32>,
    %c0_14 = arith.constant 0 : index
    %c0_15 = arith.constant 0 : index
    %22 = vector.load %arg10[%c0_14, %c0_15] : memref<8x128xf32, #tpu.memory_space<vmem>>, vector<8x128xf32>
    %c0_16 = arith.constant 0 : index
    %c0_17 = arith.constant 0 : index
    %23 = vector.load %arg11[%c0_16, %c0_17] : memref<8x128xf32, #tpu.memory_space<vmem>>, vector<8x128xf32>
    %c0_18 = arith.constant 0 : index
    %c0_19 = arith.constant 0 : index
    %24 = vector.load %arg9[%c0_18, %c0_19] : memref<64x512xf32, #tpu.memory_space<vmem>>, vector<8x512xf32>
    %25 = arith.truncf %22 : vector<8x128xf32> to vector<8x128xbf16>
    %cst_20 = arith.constant dense<0.000000e+00> : vector<8x512xf32>
    %26 = tpu.matmul %25, %11, %cst_20 {dimension_numbers = #tpu.dot_dimension_numbers<[1], [0], [0], [1], [0, 0, 1, 1], [], []>} : vector<8x128xbf16>, vector<128x512xbf16>, vector<8x512xf32> -> vector<8x512xf32>
    %27 = arith.addf %24, %26 : vector<8x512xf32>
    %28 = vector.extract_strided_slice %27 {offsets = [0, 0], sizes = [8, 128], strides = [1, 1]} : vector<8x512xf32> to vector<8x128xf32>
    %cst_21 = arith.constant 5.000000e-01 : f32
    %29 = vector.broadcast %cst_21 : f32 to vector<8x128xf32>
    %30 = arith.mulf %29, %28 : vector<8x128xf32>
    %31 = math.tanh %30 : vector<8x128xf32>
    %cst_22 = arith.constant 5.000000e-01 : f32
    %32 = vector.broadcast %cst_22 : f32 to vector<8x128xf32>
    %33 = arith.mulf %32, %31 : vector<8x128xf32>
    %cst_23 = arith.constant 5.000000e-01 : f32
    %34 = vector.broadcast %cst_23 : f32 to vector<8x128xf32>
    %35 = arith.addf %33, %34 : vector<8x128xf32>
    %36 = vector.extract_strided_slice %27 {offsets = [0, 128], sizes = [8, 128], strides = [1, 1]} : vector<8x512xf32> to vector<8x128xf32>
    %cst_24 = arith.constant 5.000000e-01 : f32
    %37 = vector.broadcast %cst_24 : f32 to vector<8x128xf32>
    %38 = arith.mulf %37, %36 : vector<8x128xf32>
    %39 = math.tanh %38 : vector<8x128xf32>
    %cst_25 = arith.constant 5.000000e-01 : f32
    %40 = vector.broadcast %cst_25 : f32 to vector<8x128xf32>
    %41 = arith.mulf %40, %39 : vector<8x128xf32>
    %cst_26 = arith.constant 5.000000e-01 : f32
    %42 = vector.broadcast %cst_26 : f32 to vector<8x128xf32>
    %43 = arith.addf %41, %42 : vector<8x128xf32>
    %44 = vector.extract_strided_slice %27 {offsets = [0, 256], sizes = [8, 128], strides = [1, 1]} : vector<8x512xf32> to vector<8x128xf32>
    %45 = math.tanh %44 : vector<8x128xf32>
    %46 = vector.extract_strided_slice %27 {offsets = [0, 384], sizes = [8, 128], strides = [1, 1]} : vector<8x512xf32> to vector<8x128xf32>
    %cst_27 = arith.constant 5.000000e-01 : f32
    %47 = vector.broadcast %cst_27 : f32 to vector<8x128xf32>
    %48 = arith.mulf %47, %46 : vector<8x128xf32>
    %49 = math.tanh %48 : vector<8x128xf32>
    %cst_28 = arith.constant 5.000000e-01 : f32
    %50 = vector.broadcast %cst_28 : f32 to vector<8x128xf32>
    %51 = arith.mulf %50, %49 : vector<8x128xf32>
    %cst_29 = arith.constant 5.000000e-01 : f32
    %52 = vector.broadcast %cst_29 : f32 to vector<8x128xf32>
    %53 = arith.addf %51, %52 : vector<8x128xf32>
    %54 = arith.mulf %43, %23 : vector<8x128xf32>
    %55 = arith.mulf %35, %45 : vector<8x128xf32>
    %56 = arith.addf %54, %55 : vector<8x128xf32>
    %57 = math.tanh %56 : vector<8x128xf32>
    %58 = arith.mulf %53, %57 : vector<8x128xf32>
    %c0_i32_30 = arith.constant 0 : i32
    %59 = arith.addi %1, %c0_i32_30 : i32
    %60 = arith.index_cast %59 : i32 to index
    %c0_31 = arith.constant 0 : index
    %c0_32 = arith.constant 0 : index
    %61 = vector.load %arg8[%60, %c0_31, %c0_32] : memref<8x8x128xf32, #tpu.memory_space<vmem>>, vector<1x8x128xf32>
    %62 = vector.shape_cast %61 : vector<1x8x128xf32> to vector<8x128xf32>
    %63 = vector.shape_cast %58 : vector<8x128xf32> to vector<1x8x128xf32>
    tpu.vector_store %arg8[%60, %c0_31, %c0_32], %63 {strides = array<i32>} : memref<8x8x128xf32, #tpu.memory_space<vmem>>, vector<1x8x128xf32>,
    %c8 = arith.constant 8 : index
    %c0_33 = arith.constant 0 : index
    %64 = vector.load %arg9[%c8, %c0_33] : memref<64x512xf32, #tpu.memory_space<vmem>>, vector<8x512xf32>
    %65 = arith.truncf %58 : vector<8x128xf32> to vector<8x128xbf16>
    %cst_34 = arith.constant dense<0.000000e+00> : vector<8x512xf32>
    %66 = tpu.matmul %65, %11, %cst_34 {dimension_numbers = #tpu.dot_dimension_numbers<[1], [0], [0], [1], [0, 0, 1, 1], [], []>} : vector<8x128xbf16>, vector<128x512xbf16>, vector<8x512xf32> -> vector<8x512xf32>
    %67 = arith.addf %64, %66 : vector<8x512xf32>
    %68 = vector.extract_strided_slice %67 {offsets = [0, 0], sizes = [8, 128], strides = [1, 1]} : vector<8x512xf32> to vector<8x128xf32>
    %cst_35 = arith.constant 5.000000e-01 : f32
    %69 = vector.broadcast %cst_35 : f32 to vector<8x128xf32>
    %70 = arith.mulf %69, %68 : vector<8x128xf32>
    %71 = math.tanh %70 : vector<8x128xf32>
    %cst_36 = arith.constant 5.000000e-01 : f32
    %72 = vector.broadcast %cst_36 : f32 to vector<8x128xf32>
    %73 = arith.mulf %72, %71 : vector<8x128xf32>
    %cst_37 = arith.constant 5.000000e-01 : f32
    %74 = vector.broadcast %cst_37 : f32 to vector<8x128xf32>
    %75 = arith.addf %73, %74 : vector<8x128xf32>
    %76 = vector.extract_strided_slice %67 {offsets = [0, 128], sizes = [8, 128], strides = [1, 1]} : vector<8x512xf32> to vector<8x128xf32>
    %cst_38 = arith.constant 5.000000e-01 : f32
    %77 = vector.broadcast %cst_38 : f32 to vector<8x128xf32>
    %78 = arith.mulf %77, %76 : vector<8x128xf32>
    %79 = math.tanh %78 : vector<8x128xf32>
    %cst_39 = arith.constant 5.000000e-01 : f32
    %80 = vector.broadcast %cst_39 : f32 to vector<8x128xf32>
    %81 = arith.mulf %80, %79 : vector<8x128xf32>
    %cst_40 = arith.constant 5.000000e-01 : f32
    %82 = vector.broadcast %cst_40 : f32 to vector<8x128xf32>
    %83 = arith.addf %81, %82 : vector<8x128xf32>
    %84 = vector.extract_strided_slice %67 {offsets = [0, 256], sizes = [8, 128], strides = [1, 1]} : vector<8x512xf32> to vector<8x128xf32>
    %85 = math.tanh %84 : vector<8x128xf32>
    %86 = vector.extract_strided_slice %67 {offsets = [0, 384], sizes = [8, 128], strides = [1, 1]} : vector<8x512xf32> to vector<8x128xf32>
    %cst_41 = arith.constant 5.000000e-01 : f32
    %87 = vector.broadcast %cst_41 : f32 to vector<8x128xf32>
    %88 = arith.mulf %87, %86 : vector<8x128xf32>
    %89 = math.tanh %88 : vector<8x128xf32>
    %cst_42 = arith.constant 5.000000e-01 : f32
    %90 = vector.broadcast %cst_42 : f32 to vector<8x128xf32>
    %91 = arith.mulf %90, %89 : vector<8x128xf32>
    %cst_43 = arith.constant 5.000000e-01 : f32
    %92 = vector.broadcast %cst_43 : f32 to vector<8x128xf32>
    %93 = arith.addf %91, %92 : vector<8x128xf32>
    %94 = arith.mulf %83, %56 : vector<8x128xf32>
    %95 = arith.mulf %75, %85 : vector<8x128xf32>
    %96 = arith.addf %94, %95 : vector<8x128xf32>
    %97 = math.tanh %96 : vector<8x128xf32>
    %98 = arith.mulf %93, %97 : vector<8x128xf32>
    %c1_i32 = arith.constant 1 : i32
    %99 = arith.addi %1, %c1_i32 : i32
    %100 = arith.index_cast %99 : i32 to index
    %c0_44 = arith.constant 0 : index
    %c0_45 = arith.constant 0 : index
    %101 = vector.load %arg8[%100, %c0_44, %c0_45] : memref<8x8x128xf32, #tpu.memory_space<vmem>>, vector<1x8x128xf32>
    %102 = vector.shape_cast %101 : vector<1x8x128xf32> to vector<8x128xf32>
    %103 = vector.shape_cast %98 : vector<8x128xf32> to vector<1x8x128xf32>
    tpu.vector_store %arg8[%100, %c0_44, %c0_45], %103 {strides = array<i32>} : memref<8x8x128xf32, #tpu.memory_space<vmem>>, vector<1x8x128xf32>,
    %c16 = arith.constant 16 : index
    %c0_46 = arith.constant 0 : index
    %104 = vector.load %arg9[%c16, %c0_46] : memref<64x512xf32, #tpu.memory_space<vmem>>, vector<8x512xf32>
    %105 = arith.truncf %98 : vector<8x128xf32> to vector<8x128xbf16>
    %cst_47 = arith.constant dense<0.000000e+00> : vector<8x512xf32>
    %106 = tpu.matmul %105, %11, %cst_47 {dimension_numbers = #tpu.dot_dimension_numbers<[1], [0], [0], [1], [0, 0, 1, 1], [], []>} : vector<8x128xbf16>, vector<128x512xbf16>, vector<8x512xf32> -> vector<8x512xf32>
    %107 = arith.addf %104, %106 : vector<8x512xf32>
    %108 = vector.extract_strided_slice %107 {offsets = [0, 0], sizes = [8, 128], strides = [1, 1]} : vector<8x512xf32> to vector<8x128xf32>
    %cst_48 = arith.constant 5.000000e-01 : f32
    %109 = vector.broadcast %cst_48 : f32 to vector<8x128xf32>
    %110 = arith.mulf %109, %108 : vector<8x128xf32>
    %111 = math.tanh %110 : vector<8x128xf32>
    %cst_49 = arith.constant 5.000000e-01 : f32
    %112 = vector.broadcast %cst_49 : f32 to vector<8x128xf32>
    %113 = arith.mulf %112, %111 : vector<8x128xf32>
    %cst_50 = arith.constant 5.000000e-01 : f32
    %114 = vector.broadcast %cst_50 : f32 to vector<8x128xf32>
    %115 = arith.addf %113, %114 : vector<8x128xf32>
    %116 = vector.extract_strided_slice %107 {offsets = [0, 128], sizes = [8, 128], strides = [1, 1]} : vector<8x512xf32> to vector<8x128xf32>
    %cst_51 = arith.constant 5.000000e-01 : f32
    %117 = vector.broadcast %cst_51 : f32 to vector<8x128xf32>
    %118 = arith.mulf %117, %116 : vector<8x128xf32>
    %119 = math.tanh %118 : vector<8x128xf32>
    %cst_52 = arith.constant 5.000000e-01 : f32
    %120 = vector.broadcast %cst_52 : f32 to vector<8x128xf32>
    %121 = arith.mulf %120, %119 : vector<8x128xf32>
    %cst_53 = arith.constant 5.000000e-01 : f32
    %122 = vector.broadcast %cst_53 : f32 to vector<8x128xf32>
    %123 = arith.addf %121, %122 : vector<8x128xf32>
    %124 = vector.extract_strided_slice %107 {offsets = [0, 256], sizes = [8, 128], strides = [1, 1]} : vector<8x512xf32> to vector<8x128xf32>
    %125 = math.tanh %124 : vector<8x128xf32>
    %126 = vector.extract_strided_slice %107 {offsets = [0, 384], sizes = [8, 128], strides = [1, 1]} : vector<8x512xf32> to vector<8x128xf32>
    %cst_54 = arith.constant 5.000000e-01 : f32
    %127 = vector.broadcast %cst_54 : f32 to vector<8x128xf32>
    %128 = arith.mulf %127, %126 : vector<8x128xf32>
    %129 = math.tanh %128 : vector<8x128xf32>
    %cst_55 = arith.constant 5.000000e-01 : f32
    %130 = vector.broadcast %cst_55 : f32 to vector<8x128xf32>
    %131 = arith.mulf %130, %129 : vector<8x128xf32>
    %cst_56 = arith.constant 5.000000e-01 : f32
    %132 = vector.broadcast %cst_56 : f32 to vector<8x128xf32>
    %133 = arith.addf %131, %132 : vector<8x128xf32>
    %134 = arith.mulf %123, %96 : vector<8x128xf32>
    %135 = arith.mulf %115, %125 : vector<8x128xf32>
    %136 = arith.addf %134, %135 : vector<8x128xf32>
    %137 = math.tanh %136 : vector<8x128xf32>
    %138 = arith.mulf %133, %137 : vector<8x128xf32>
    %c2_i32 = arith.constant 2 : i32
    %139 = arith.addi %1, %c2_i32 : i32
    %140 = arith.index_cast %139 : i32 to index
    %c0_57 = arith.constant 0 : index
    %c0_58 = arith.constant 0 : index
    %141 = vector.load %arg8[%140, %c0_57, %c0_58] : memref<8x8x128xf32, #tpu.memory_space<vmem>>, vector<1x8x128xf32>
    %142 = vector.shape_cast %141 : vector<1x8x128xf32> to vector<8x128xf32>
    %143 = vector.shape_cast %138 : vector<8x128xf32> to vector<1x8x128xf32>
    tpu.vector_store %arg8[%140, %c0_57, %c0_58], %143 {strides = array<i32>} : memref<8x8x128xf32, #tpu.memory_space<vmem>>, vector<1x8x128xf32>,
    %c24 = arith.constant 24 : index
    %c0_59 = arith.constant 0 : index
    %144 = vector.load %arg9[%c24, %c0_59] : memref<64x512xf32, #tpu.memory_space<vmem>>, vector<8x512xf32>
    %145 = arith.truncf %138 : vector<8x128xf32> to vector<8x128xbf16>
    %cst_60 = arith.constant dense<0.000000e+00> : vector<8x512xf32>
    %146 = tpu.matmul %145, %11, %cst_60 {dimension_numbers = #tpu.dot_dimension_numbers<[1], [0], [0], [1], [0, 0, 1, 1], [], []>} : vector<8x128xbf16>, vector<128x512xbf16>, vector<8x512xf32> -> vector<8x512xf32>
    %147 = arith.addf %144, %146 : vector<8x512xf32>
    %148 = vector.extract_strided_slice %147 {offsets = [0, 0], sizes = [8, 128], strides = [1, 1]} : vector<8x512xf32> to vector<8x128xf32>
    %cst_61 = arith.constant 5.000000e-01 : f32
    %149 = vector.broadcast %cst_61 : f32 to vector<8x128xf32>
    %150 = arith.mulf %149, %148 : vector<8x128xf32>
    %151 = math.tanh %150 : vector<8x128xf32>
    %cst_62 = arith.constant 5.000000e-01 : f32
    %152 = vector.broadcast %cst_62 : f32 to vector<8x128xf32>
    %153 = arith.mulf %152, %151 : vector<8x128xf32>
    %cst_63 = arith.constant 5.000000e-01 : f32
    %154 = vector.broadcast %cst_63 : f32 to vector<8x128xf32>
    %155 = arith.addf %153, %154 : vector<8x128xf32>
    %156 = vector.extract_strided_slice %147 {offsets = [0, 128], sizes = [8, 128], strides = [1, 1]} : vector<8x512xf32> to vector<8x128xf32>
    %cst_64 = arith.constant 5.000000e-01 : f32
    %157 = vector.broadcast %cst_64 : f32 to vector<8x128xf32>
    %158 = arith.mulf %157, %156 : vector<8x128xf32>
    %159 = math.tanh %158 : vector<8x128xf32>
    %cst_65 = arith.constant 5.000000e-01 : f32
    %160 = vector.broadcast %cst_65 : f32 to vector<8x128xf32>
    %161 = arith.mulf %160, %159 : vector<8x128xf32>
    %cst_66 = arith.constant 5.000000e-01 : f32
    %162 = vector.broadcast %cst_66 : f32 to vector<8x128xf32>
    %163 = arith.addf %161, %162 : vector<8x128xf32>
    %164 = vector.extract_strided_slice %147 {offsets = [0, 256], sizes = [8, 128], strides = [1, 1]} : vector<8x512xf32> to vector<8x128xf32>
    %165 = math.tanh %164 : vector<8x128xf32>
    %166 = vector.extract_strided_slice %147 {offsets = [0, 384], sizes = [8, 128], strides = [1, 1]} : vector<8x512xf32> to vector<8x128xf32>
    %cst_67 = arith.constant 5.000000e-01 : f32
    %167 = vector.broadcast %cst_67 : f32 to vector<8x128xf32>
    %168 = arith.mulf %167, %166 : vector<8x128xf32>
    %169 = math.tanh %168 : vector<8x128xf32>
    %cst_68 = arith.constant 5.000000e-01 : f32
    %170 = vector.broadcast %cst_68 : f32 to vector<8x128xf32>
    %171 = arith.mulf %170, %169 : vector<8x128xf32>
    %cst_69 = arith.constant 5.000000e-01 : f32
    %172 = vector.broadcast %cst_69 : f32 to vector<8x128xf32>
    %173 = arith.addf %171, %172 : vector<8x128xf32>
    %174 = arith.mulf %163, %136 : vector<8x128xf32>
    %175 = arith.mulf %155, %165 : vector<8x128xf32>
    %176 = arith.addf %174, %175 : vector<8x128xf32>
    %177 = math.tanh %176 : vector<8x128xf32>
    %178 = arith.mulf %173, %177 : vector<8x128xf32>
    %c3_i32 = arith.constant 3 : i32
    %179 = arith.addi %1, %c3_i32 : i32
    %180 = arith.index_cast %179 : i32 to index
    %c0_70 = arith.constant 0 : index
    %c0_71 = arith.constant 0 : index
    %181 = vector.load %arg8[%180, %c0_70, %c0_71] : memref<8x8x128xf32, #tpu.memory_space<vmem>>, vector<1x8x128xf32>
    %182 = vector.shape_cast %181 : vector<1x8x128xf32> to vector<8x128xf32>
    %183 = vector.shape_cast %178 : vector<8x128xf32> to vector<1x8x128xf32>
    tpu.vector_store %arg8[%180, %c0_70, %c0_71], %183 {strides = array<i32>} : memref<8x8x128xf32, #tpu.memory_space<vmem>>, vector<1x8x128xf32>,
    %c32 = arith.constant 32 : index
    %c0_72 = arith.constant 0 : index
    %184 = vector.load %arg9[%c32, %c0_72] : memref<64x512xf32, #tpu.memory_space<vmem>>, vector<8x512xf32>
    %185 = arith.truncf %178 : vector<8x128xf32> to vector<8x128xbf16>
    %cst_73 = arith.constant dense<0.000000e+00> : vector<8x512xf32>
    %186 = tpu.matmul %185, %11, %cst_73 {dimension_numbers = #tpu.dot_dimension_numbers<[1], [0], [0], [1], [0, 0, 1, 1], [], []>} : vector<8x128xbf16>, vector<128x512xbf16>, vector<8x512xf32> -> vector<8x512xf32>
    %187 = arith.addf %184, %186 : vector<8x512xf32>
    %188 = vector.extract_strided_slice %187 {offsets = [0, 0], sizes = [8, 128], strides = [1, 1]} : vector<8x512xf32> to vector<8x128xf32>
    %cst_74 = arith.constant 5.000000e-01 : f32
    %189 = vector.broadcast %cst_74 : f32 to vector<8x128xf32>
    %190 = arith.mulf %189, %188 : vector<8x128xf32>
    %191 = math.tanh %190 : vector<8x128xf32>
    %cst_75 = arith.constant 5.000000e-01 : f32
    %192 = vector.broadcast %cst_75 : f32 to vector<8x128xf32>
    %193 = arith.mulf %192, %191 : vector<8x128xf32>
    %cst_76 = arith.constant 5.000000e-01 : f32
    %194 = vector.broadcast %cst_76 : f32 to vector<8x128xf32>
    %195 = arith.addf %193, %194 : vector<8x128xf32>
    %196 = vector.extract_strided_slice %187 {offsets = [0, 128], sizes = [8, 128], strides = [1, 1]} : vector<8x512xf32> to vector<8x128xf32>
    %cst_77 = arith.constant 5.000000e-01 : f32
    %197 = vector.broadcast %cst_77 : f32 to vector<8x128xf32>
    %198 = arith.mulf %197, %196 : vector<8x128xf32>
    %199 = math.tanh %198 : vector<8x128xf32>
    %cst_78 = arith.constant 5.000000e-01 : f32
    %200 = vector.broadcast %cst_78 : f32 to vector<8x128xf32>
    %201 = arith.mulf %200, %199 : vector<8x128xf32>
    %cst_79 = arith.constant 5.000000e-01 : f32
    %202 = vector.broadcast %cst_79 : f32 to vector<8x128xf32>
    %203 = arith.addf %201, %202 : vector<8x128xf32>
    %204 = vector.extract_strided_slice %187 {offsets = [0, 256], sizes = [8, 128], strides = [1, 1]} : vector<8x512xf32> to vector<8x128xf32>
    %205 = math.tanh %204 : vector<8x128xf32>
    %206 = vector.extract_strided_slice %187 {offsets = [0, 384], sizes = [8, 128], strides = [1, 1]} : vector<8x512xf32> to vector<8x128xf32>
    %cst_80 = arith.constant 5.000000e-01 : f32
    %207 = vector.broadcast %cst_80 : f32 to vector<8x128xf32>
    %208 = arith.mulf %207, %206 : vector<8x128xf32>
    %209 = math.tanh %208 : vector<8x128xf32>
    %cst_81 = arith.constant 5.000000e-01 : f32
    %210 = vector.broadcast %cst_81 : f32 to vector<8x128xf32>
    %211 = arith.mulf %210, %209 : vector<8x128xf32>
    %cst_82 = arith.constant 5.000000e-01 : f32
    %212 = vector.broadcast %cst_82 : f32 to vector<8x128xf32>
    %213 = arith.addf %211, %212 : vector<8x128xf32>
    %214 = arith.mulf %203, %176 : vector<8x128xf32>
    %215 = arith.mulf %195, %205 : vector<8x128xf32>
    %216 = arith.addf %214, %215 : vector<8x128xf32>
    %217 = math.tanh %216 : vector<8x128xf32>
    %218 = arith.mulf %213, %217 : vector<8x128xf32>
    %c4_i32 = arith.constant 4 : i32
    %219 = arith.addi %1, %c4_i32 : i32
    %220 = arith.index_cast %219 : i32 to index
    %c0_83 = arith.constant 0 : index
    %c0_84 = arith.constant 0 : index
    %221 = vector.load %arg8[%220, %c0_83, %c0_84] : memref<8x8x128xf32, #tpu.memory_space<vmem>>, vector<1x8x128xf32>
    %222 = vector.shape_cast %221 : vector<1x8x128xf32> to vector<8x128xf32>
    %223 = vector.shape_cast %218 : vector<8x128xf32> to vector<1x8x128xf32>
    tpu.vector_store %arg8[%220, %c0_83, %c0_84], %223 {strides = array<i32>} : memref<8x8x128xf32, #tpu.memory_space<vmem>>, vector<1x8x128xf32>,
    %c40 = arith.constant 40 : index
    %c0_85 = arith.constant 0 : index
    %224 = vector.load %arg9[%c40, %c0_85] : memref<64x512xf32, #tpu.memory_space<vmem>>, vector<8x512xf32>
    %225 = arith.truncf %218 : vector<8x128xf32> to vector<8x128xbf16>
    %cst_86 = arith.constant dense<0.000000e+00> : vector<8x512xf32>
    %226 = tpu.matmul %225, %11, %cst_86 {dimension_numbers = #tpu.dot_dimension_numbers<[1], [0], [0], [1], [0, 0, 1, 1], [], []>} : vector<8x128xbf16>, vector<128x512xbf16>, vector<8x512xf32> -> vector<8x512xf32>
    %227 = arith.addf %224, %226 : vector<8x512xf32>
    %228 = vector.extract_strided_slice %227 {offsets = [0, 0], sizes = [8, 128], strides = [1, 1]} : vector<8x512xf32> to vector<8x128xf32>
    %cst_87 = arith.constant 5.000000e-01 : f32
    %229 = vector.broadcast %cst_87 : f32 to vector<8x128xf32>
    %230 = arith.mulf %229, %228 : vector<8x128xf32>
    %231 = math.tanh %230 : vector<8x128xf32>
    %cst_88 = arith.constant 5.000000e-01 : f32
    %232 = vector.broadcast %cst_88 : f32 to vector<8x128xf32>
    %233 = arith.mulf %232, %231 : vector<8x128xf32>
    %cst_89 = arith.constant 5.000000e-01 : f32
    %234 = vector.broadcast %cst_89 : f32 to vector<8x128xf32>
    %235 = arith.addf %233, %234 : vector<8x128xf32>
    %236 = vector.extract_strided_slice %227 {offsets = [0, 128], sizes = [8, 128], strides = [1, 1]} : vector<8x512xf32> to vector<8x128xf32>
    %cst_90 = arith.constant 5.000000e-01 : f32
    %237 = vector.broadcast %cst_90 : f32 to vector<8x128xf32>
    %238 = arith.mulf %237, %236 : vector<8x128xf32>
    %239 = math.tanh %238 : vector<8x128xf32>
    %cst_91 = arith.constant 5.000000e-01 : f32
    %240 = vector.broadcast %cst_91 : f32 to vector<8x128xf32>
    %241 = arith.mulf %240, %239 : vector<8x128xf32>
    %cst_92 = arith.constant 5.000000e-01 : f32
    %242 = vector.broadcast %cst_92 : f32 to vector<8x128xf32>
    %243 = arith.addf %241, %242 : vector<8x128xf32>
    %244 = vector.extract_strided_slice %227 {offsets = [0, 256], sizes = [8, 128], strides = [1, 1]} : vector<8x512xf32> to vector<8x128xf32>
    %245 = math.tanh %244 : vector<8x128xf32>
    %246 = vector.extract_strided_slice %227 {offsets = [0, 384], sizes = [8, 128], strides = [1, 1]} : vector<8x512xf32> to vector<8x128xf32>
    %cst_93 = arith.constant 5.000000e-01 : f32
    %247 = vector.broadcast %cst_93 : f32 to vector<8x128xf32>
    %248 = arith.mulf %247, %246 : vector<8x128xf32>
    %249 = math.tanh %248 : vector<8x128xf32>
    %cst_94 = arith.constant 5.000000e-01 : f32
    %250 = vector.broadcast %cst_94 : f32 to vector<8x128xf32>
    %251 = arith.mulf %250, %249 : vector<8x128xf32>
    %cst_95 = arith.constant 5.000000e-01 : f32
    %252 = vector.broadcast %cst_95 : f32 to vector<8x128xf32>
    %253 = arith.addf %251, %252 : vector<8x128xf32>
    %254 = arith.mulf %243, %216 : vector<8x128xf32>
    %255 = arith.mulf %235, %245 : vector<8x128xf32>
    %256 = arith.addf %254, %255 : vector<8x128xf32>
    %257 = math.tanh %256 : vector<8x128xf32>
    %258 = arith.mulf %253, %257 : vector<8x128xf32>
    %c5_i32 = arith.constant 5 : i32
    %259 = arith.addi %1, %c5_i32 : i32
    %260 = arith.index_cast %259 : i32 to index
    %c0_96 = arith.constant 0 : index
    %c0_97 = arith.constant 0 : index
    %261 = vector.load %arg8[%260, %c0_96, %c0_97] : memref<8x8x128xf32, #tpu.memory_space<vmem>>, vector<1x8x128xf32>
    %262 = vector.shape_cast %261 : vector<1x8x128xf32> to vector<8x128xf32>
    %263 = vector.shape_cast %258 : vector<8x128xf32> to vector<1x8x128xf32>
    tpu.vector_store %arg8[%260, %c0_96, %c0_97], %263 {strides = array<i32>} : memref<8x8x128xf32, #tpu.memory_space<vmem>>, vector<1x8x128xf32>,
    %c48 = arith.constant 48 : index
    %c0_98 = arith.constant 0 : index
    %264 = vector.load %arg9[%c48, %c0_98] : memref<64x512xf32, #tpu.memory_space<vmem>>, vector<8x512xf32>
    %265 = arith.truncf %258 : vector<8x128xf32> to vector<8x128xbf16>
    %cst_99 = arith.constant dense<0.000000e+00> : vector<8x512xf32>
    %266 = tpu.matmul %265, %11, %cst_99 {dimension_numbers = #tpu.dot_dimension_numbers<[1], [0], [0], [1], [0, 0, 1, 1], [], []>} : vector<8x128xbf16>, vector<128x512xbf16>, vector<8x512xf32> -> vector<8x512xf32>
    %267 = arith.addf %264, %266 : vector<8x512xf32>
    %268 = vector.extract_strided_slice %267 {offsets = [0, 0], sizes = [8, 128], strides = [1, 1]} : vector<8x512xf32> to vector<8x128xf32>
    %cst_100 = arith.constant 5.000000e-01 : f32
    %269 = vector.broadcast %cst_100 : f32 to vector<8x128xf32>
    %270 = arith.mulf %269, %268 : vector<8x128xf32>
    %271 = math.tanh %270 : vector<8x128xf32>
    %cst_101 = arith.constant 5.000000e-01 : f32
    %272 = vector.broadcast %cst_101 : f32 to vector<8x128xf32>
    %273 = arith.mulf %272, %271 : vector<8x128xf32>
    %cst_102 = arith.constant 5.000000e-01 : f32
    %274 = vector.broadcast %cst_102 : f32 to vector<8x128xf32>
    %275 = arith.addf %273, %274 : vector<8x128xf32>
    %276 = vector.extract_strided_slice %267 {offsets = [0, 128], sizes = [8, 128], strides = [1, 1]} : vector<8x512xf32> to vector<8x128xf32>
    %cst_103 = arith.constant 5.000000e-01 : f32
    %277 = vector.broadcast %cst_103 : f32 to vector<8x128xf32>
    %278 = arith.mulf %277, %276 : vector<8x128xf32>
    %279 = math.tanh %278 : vector<8x128xf32>
    %cst_104 = arith.constant 5.000000e-01 : f32
    %280 = vector.broadcast %cst_104 : f32 to vector<8x128xf32>
    %281 = arith.mulf %280, %279 : vector<8x128xf32>
    %cst_105 = arith.constant 5.000000e-01 : f32
    %282 = vector.broadcast %cst_105 : f32 to vector<8x128xf32>
    %283 = arith.addf %281, %282 : vector<8x128xf32>
    %284 = vector.extract_strided_slice %267 {offsets = [0, 256], sizes = [8, 128], strides = [1, 1]} : vector<8x512xf32> to vector<8x128xf32>
    %285 = math.tanh %284 : vector<8x128xf32>
    %286 = vector.extract_strided_slice %267 {offsets = [0, 384], sizes = [8, 128], strides = [1, 1]} : vector<8x512xf32> to vector<8x128xf32>
    %cst_106 = arith.constant 5.000000e-01 : f32
    %287 = vector.broadcast %cst_106 : f32 to vector<8x128xf32>
    %288 = arith.mulf %287, %286 : vector<8x128xf32>
    %289 = math.tanh %288 : vector<8x128xf32>
    %cst_107 = arith.constant 5.000000e-01 : f32
    %290 = vector.broadcast %cst_107 : f32 to vector<8x128xf32>
    %291 = arith.mulf %290, %289 : vector<8x128xf32>
    %cst_108 = arith.constant 5.000000e-01 : f32
    %292 = vector.broadcast %cst_108 : f32 to vector<8x128xf32>
    %293 = arith.addf %291, %292 : vector<8x128xf32>
    %294 = arith.mulf %283, %256 : vector<8x128xf32>
    %295 = arith.mulf %275, %285 : vector<8x128xf32>
    %296 = arith.addf %294, %295 : vector<8x128xf32>
    %297 = math.tanh %296 : vector<8x128xf32>
    %298 = arith.mulf %293, %297 : vector<8x128xf32>
    %c6_i32 = arith.constant 6 : i32
    %299 = arith.addi %1, %c6_i32 : i32
    %300 = arith.index_cast %299 : i32 to index
    %c0_109 = arith.constant 0 : index
    %c0_110 = arith.constant 0 : index
    %301 = vector.load %arg8[%300, %c0_109, %c0_110] : memref<8x8x128xf32, #tpu.memory_space<vmem>>, vector<1x8x128xf32>
    %302 = vector.shape_cast %301 : vector<1x8x128xf32> to vector<8x128xf32>
    %303 = vector.shape_cast %298 : vector<8x128xf32> to vector<1x8x128xf32>
    tpu.vector_store %arg8[%300, %c0_109, %c0_110], %303 {strides = array<i32>} : memref<8x8x128xf32, #tpu.memory_space<vmem>>, vector<1x8x128xf32>,
    %c56 = arith.constant 56 : index
    %c0_111 = arith.constant 0 : index
    %304 = vector.load %arg9[%c56, %c0_111] : memref<64x512xf32, #tpu.memory_space<vmem>>, vector<8x512xf32>
    %305 = arith.truncf %298 : vector<8x128xf32> to vector<8x128xbf16>
    %cst_112 = arith.constant dense<0.000000e+00> : vector<8x512xf32>
    %306 = tpu.matmul %305, %11, %cst_112 {dimension_numbers = #tpu.dot_dimension_numbers<[1], [0], [0], [1], [0, 0, 1, 1], [], []>} : vector<8x128xbf16>, vector<128x512xbf16>, vector<8x512xf32> -> vector<8x512xf32>
    %307 = arith.addf %304, %306 : vector<8x512xf32>
    %308 = vector.extract_strided_slice %307 {offsets = [0, 0], sizes = [8, 128], strides = [1, 1]} : vector<8x512xf32> to vector<8x128xf32>
    %cst_113 = arith.constant 5.000000e-01 : f32
    %309 = vector.broadcast %cst_113 : f32 to vector<8x128xf32>
    %310 = arith.mulf %309, %308 : vector<8x128xf32>
    %311 = math.tanh %310 : vector<8x128xf32>
    %cst_114 = arith.constant 5.000000e-01 : f32
    %312 = vector.broadcast %cst_114 : f32 to vector<8x128xf32>
    %313 = arith.mulf %312, %311 : vector<8x128xf32>
    %cst_115 = arith.constant 5.000000e-01 : f32
    %314 = vector.broadcast %cst_115 : f32 to vector<8x128xf32>
    %315 = arith.addf %313, %314 : vector<8x128xf32>
    %316 = vector.extract_strided_slice %307 {offsets = [0, 128], sizes = [8, 128], strides = [1, 1]} : vector<8x512xf32> to vector<8x128xf32>
    %cst_116 = arith.constant 5.000000e-01 : f32
    %317 = vector.broadcast %cst_116 : f32 to vector<8x128xf32>
    %318 = arith.mulf %317, %316 : vector<8x128xf32>
    %319 = math.tanh %318 : vector<8x128xf32>
    %cst_117 = arith.constant 5.000000e-01 : f32
    %320 = vector.broadcast %cst_117 : f32 to vector<8x128xf32>
    %321 = arith.mulf %320, %319 : vector<8x128xf32>
    %cst_118 = arith.constant 5.000000e-01 : f32
    %322 = vector.broadcast %cst_118 : f32 to vector<8x128xf32>
    %323 = arith.addf %321, %322 : vector<8x128xf32>
    %324 = vector.extract_strided_slice %307 {offsets = [0, 256], sizes = [8, 128], strides = [1, 1]} : vector<8x512xf32> to vector<8x128xf32>
    %325 = math.tanh %324 : vector<8x128xf32>
    %326 = vector.extract_strided_slice %307 {offsets = [0, 384], sizes = [8, 128], strides = [1, 1]} : vector<8x512xf32> to vector<8x128xf32>
    %cst_119 = arith.constant 5.000000e-01 : f32
    %327 = vector.broadcast %cst_119 : f32 to vector<8x128xf32>
    %328 = arith.mulf %327, %326 : vector<8x128xf32>
    %329 = math.tanh %328 : vector<8x128xf32>
    %cst_120 = arith.constant 5.000000e-01 : f32
    %330 = vector.broadcast %cst_120 : f32 to vector<8x128xf32>
    %331 = arith.mulf %330, %329 : vector<8x128xf32>
    %cst_121 = arith.constant 5.000000e-01 : f32
    %332 = vector.broadcast %cst_121 : f32 to vector<8x128xf32>
    %333 = arith.addf %331, %332 : vector<8x128xf32>
    %334 = arith.mulf %323, %296 : vector<8x128xf32>
    %335 = arith.mulf %315, %325 : vector<8x128xf32>
    %336 = arith.addf %334, %335 : vector<8x128xf32>
    %337 = math.tanh %336 : vector<8x128xf32>
    %338 = arith.mulf %333, %337 : vector<8x128xf32>
    %c7_i32 = arith.constant 7 : i32
    %339 = arith.addi %1, %c7_i32 : i32
    %340 = arith.index_cast %339 : i32 to index
    %c0_122 = arith.constant 0 : index
    %c0_123 = arith.constant 0 : index
    %341 = vector.load %arg8[%340, %c0_122, %c0_123] : memref<8x8x128xf32, #tpu.memory_space<vmem>>, vector<1x8x128xf32>
    %342 = vector.shape_cast %341 : vector<1x8x128xf32> to vector<8x128xf32>
    %343 = vector.shape_cast %338 : vector<8x128xf32> to vector<1x8x128xf32>
    tpu.vector_store %arg8[%340, %c0_122, %c0_123], %343 {strides = array<i32>} : memref<8x8x128xf32, #tpu.memory_space<vmem>>, vector<1x8x128xf32>,
    %c0_124 = arith.constant 0 : index
    %c0_125 = arith.constant 0 : index
    %344 = vector.load %arg10[%c0_124, %c0_125] : memref<8x128xf32, #tpu.memory_space<vmem>>, vector<8x128xf32>
    tpu.vector_store %arg10[%c0_124, %c0_125], %338 {strides = array<i32>} : memref<8x128xf32, #tpu.memory_space<vmem>>, vector<8x128xf32>,
    %c0_126 = arith.constant 0 : index
    %c0_127 = arith.constant 0 : index
    %345 = vector.load %arg11[%c0_126, %c0_127] : memref<8x128xf32, #tpu.memory_space<vmem>>, vector<8x128xf32>
    tpu.vector_store %arg11[%c0_126, %c0_127], %336 {strides = array<i32>} : memref<8x128xf32, #tpu.memory_space<vmem>>, vector<8x128xf32>,
    %c1_i32_128 = arith.constant 1 : i32
    %346 = arith.cmpi eq, %arg0, %c1_i32_128 : i32
    %c0_i32_129 = arith.constant 0 : i32
    %347 = arith.cmpi eq, %arg1, %c0_i32_129 : i32
    %348 = arith.andi %346, %347 : i1
    %349 = arith.extui %348 : i1 to i32
    %c0_i32_130 = arith.constant 0 : i32
    %350 = arith.cmpi ne, %349, %c0_i32_130 : i32
    scf.if %350 {
      %351 = arith.truncf %338 : vector<8x128xf32> to vector<8x128xbf16>
      %c0_131 = arith.constant 0 : index
      %c0_132 = arith.constant 0 : index
      %352 = vector.load %arg5[%c0_131, %c0_132] : memref<128x128xbf16, #tpu.memory_space<vmem>>, vector<128x128xbf16>
      %cst_133 = arith.constant dense<0.000000e+00> : vector<8x128xf32>
      %353 = tpu.matmul %351, %352, %cst_133 {dimension_numbers = #tpu.dot_dimension_numbers<[1], [0], [0], [1], [0, 0, 1, 1], [], []>} : vector<8x128xbf16>, vector<128x128xbf16>, vector<8x128xf32> -> vector<8x128xf32>
      %c0_134 = arith.constant 0 : index
      %c0_135 = arith.constant 0 : index
      %354 = vector.load %arg6[%c0_134, %c0_135] : memref<1x128xf32, #tpu.memory_space<vmem>>, vector<1x128xf32>
      %355 = vector.broadcast %354 : vector<1x128xf32> to vector<8x128xf32>
      %356 = arith.addf %353, %355 : vector<8x128xf32>
      %c0_136 = arith.constant 0 : index
      %c0_137 = arith.constant 0 : index
      %357 = vector.load %arg7[%c0_136, %c0_137] : memref<8x128xf32, #tpu.memory_space<vmem>>, vector<8x128xf32>
      tpu.vector_store %arg7[%c0_136, %c0_137], %356 {strides = array<i32>} : memref<8x128xf32, #tpu.memory_space<vmem>>, vector<8x128xf32>,
    } else {
    }
    return
  }
  func.func @transform_0(%arg0: i32, %arg1: i32) -> (i32, i32, i32) {
    %c0_i32 = arith.constant 0 : i32
    %0 = arith.cmpi eq, %arg0, %c0_i32 : i32
    %c0_i32_0 = arith.constant 0 : i32
    %1 = arith.select %0, %arg1, %c0_i32_0 : i32
    %c0_i32_1 = arith.constant 0 : i32
    %c0_i32_2 = arith.constant 0 : i32
    %c0_i32_3 = arith.constant 0 : i32
    return %1, %c0_i32_1, %c0_i32_2 : i32, i32, i32
  }
  func.func @transform_1(%arg0: i32, %arg1: i32) -> (i32, i32, i32) {
    %c0_i32 = arith.constant 0 : i32
    %c0_i32_0 = arith.constant 0 : i32
    %c0_i32_1 = arith.constant 0 : i32
    return %arg0, %c0_i32, %c0_i32_0 : i32, i32, i32
  }
  func.func @transform_2(%arg0: i32, %arg1: i32) -> (i32, i32, i32) {
    %c0_i32 = arith.constant 0 : i32
    %c0_i32_0 = arith.constant 0 : i32
    %c0_i32_1 = arith.constant 0 : i32
    return %arg0, %c0_i32, %c0_i32_0 : i32, i32, i32
  }
  func.func @transform_3(%arg0: i32, %arg1: i32) -> (i32, i32) {
    %c0_i32 = arith.constant 0 : i32
    %c0_i32_0 = arith.constant 0 : i32
    %c0_i32_1 = arith.constant 0 : i32
    return %c0_i32, %c0_i32_0 : i32, i32
  }
  func.func @transform_4(%arg0: i32, %arg1: i32) -> (i32, i32) {
    %c0_i32 = arith.constant 0 : i32
    %c0_i32_0 = arith.constant 0 : i32
    %c0_i32_1 = arith.constant 0 : i32
    return %c0_i32, %c0_i32_0 : i32, i32
  }
  func.func @transform_5(%arg0: i32, %arg1: i32) -> (i32, i32) {
    %c0_i32 = arith.constant 0 : i32
    %c0_i32_0 = arith.constant 0 : i32
    %c0_i32_1 = arith.constant 0 : i32
    return %c0_i32, %c0_i32_0 : i32, i32
  }
}

</mosaic_0001>

<llo_original>
// kernel: tpu_custom_call.1
$region0: #{tpu_custom_call.1}
  #allocation0 [shape = 'u32[]', space=smem, size = 0x4, offset = 0x4, fixed_abs, tag = 'smem constant byte address 0x4 - core index']
  #allocation1 [shape = 'u32[144,128]{1,0:T(1,128)}', space=vmem, size = 0x12000, scoped, tag = 'internal scratch']
  #allocation2 [shape = 'f32[8,8,128]{2,1,0:T(8,128)}', space=vmem, size = 0x8000, scoped, tag = 'scratch operand']
  #allocation3 [shape = 'f32[64,512]{1,0:T(8,128)}', space=vmem, size = 0x20000, scoped, tag = 'scratch operand']
  #allocation4 [shape = 'f32[8,128]{1,0:T(8,128)}', space=vmem, size = 0x1000, scoped, tag = 'scratch operand']
  #allocation5 [shape = 'f32[8,128]{1,0:T(8,128)}', space=vmem, size = 0x1000, scoped, tag = 'scratch operand']
  %s0 = inlined_call_operand.hbm [shape: f32[8,8,128], index: 0, kind: input, shape index: {}]
  %s1 = inlined_call_operand.hbm [shape: bf16[2,256,512], index: 1, kind: input, shape index: {}]
  %s2 = inlined_call_operand.hbm [shape: f32[2,1,512], index: 2, kind: input, shape index: {}]
  %s3 = inlined_call_operand.hbm [shape: bf16[128,128], index: 3, kind: input, shape index: {}]
  %s4 = inlined_call_operand.vmem [shape: f32[1,128], index: 4, kind: input, shape index: {}]
  %s5 = inlined_call_operand.hbm [shape: f32[8,128], index: 5, kind: output, shape index: {}]
  %s6 = sld [smem:[#allocation0]]
  $region81: #{tpu_custom_call.1} parent=0
    _
  %s8 = ssub.s32 1, %s6
  %s9 = scalar_select 0, %s8, %s6
  $region1: #{tpu_custom_call.1} parent=0
    #allocation6 [shape = 'u8[65536]{0}', space=vmem, size = 0x10000, scoped, tag = 'input window, operand 0']
    #allocation7 [shape = 's32[2]{0}', space=sflag, size = 0x8, scoped, tag = 'scoped memory for tpu_custom_call.1']
    #allocation8 [shape = 's32[2]{0}', space=sflag, size = 0x8, scoped, tag = 'scoped memory for tpu_custom_call.1']
    #allocation9 [shape = 'u8[524288]{0}', space=vmem, size = 0x80000, scoped, tag = 'input window, operand 1']
    #allocation10 [shape = 's32[2]{0}', space=sflag, size = 0x8, scoped, tag = 'scoped memory for tpu_custom_call.1']
    #allocation11 [shape = 'u8[4096]{0}', space=vmem, size = 0x1000, scoped, tag = 'input window, operand 2']
    #allocation12 [shape = 'u8[32768]{0}', space=vmem, size = 0x8000, scoped, tag = 'input window, operand 3, single buffered']
    #allocation13 [shape = 's32[1]{0}', space=sflag, size = 0x4, scoped, tag = 'scoped memory for tpu_custom_call.1']
    #allocation14 [shape = 'u8[4096]{0}', space=vmem, size = 0x1000, scoped, tag = 'output window, operand 0, single buffered']
    %10 = vsyncpa [#allocation7], 0
    %s11 = scalar_lea.sflag [#allocation7], 1
    %12 = vsyncpa %s11, 0
    %13 = vsyncpa [#allocation10], 0
    %s14 = scalar_lea.sflag [#allocation10], 1
    %15 = vsyncpa %s14, 0
    %16 = vsyncpa [#allocation13], 0
    %17 = vsyncpa [#allocation8], 0
    loop: start=0, step=1, limit=4
    $region2: #{tpu_custom_call.1} parent=1 // loop_pre_header
      _
    $region3: #{tpu_custom_call.1} parent=1 // loop_header
      %s19 = sphi 0, %s23
      %p20 = scmp.ge.s32.totalorder %s19, 4
      %s26 = sphi 0, %s38
      %s27 = sphi 0, %s34
      %s28 = sphi 0, %s26
      %s29 = sphi 0, %s27
      %s30 = sphi 0, %s28
      %s31 = sphi 0, %s29
      %s45 = sphi 0, %s47
      %s48 = sphi 0, %s45
      %s49 = sphi 0, %s48
      %s65 = sphi 0, %s49
      %s71 = sphi 0, %s73
      %s74 = sphi 0, %s71
      %s75 = sphi 0, %s74
      %s91 = sphi 0, %s75
      %s97 = sphi 0, %s99
      %s100 = sphi 0, %s97
      %s101 = sphi 0, %s100
      %s117 = sphi 0, %s101
      %s121 = sphi 0, %s121
      %s123 = sphi 0, %s121
      %s124 = sphi 0, %s123
      %s138 = sphi 0, %s124
      %s142 = sphi 0, %s142
      %s144 = sphi 0, %s142
      %s145 = sphi 0, %s144
      %s159 = sphi 0, %s145
      %s163 = sphi 0, %s163
      %s165 = sphi 0, %s163
      %s166 = sphi 0, %s165
      %s180 = sphi 0, %s166
    $region4: #{tpu_custom_call.1} parent=1 // loop_header_branch
      %22 = sbr.rel (%p20) target = $region8
    $region5: #{tpu_custom_call.1} parent=1 // loop_body
      %s24 = ssub.s32 %s19, 1
      %s25 = ssub.s32 %s19, 2
      %s32 = sadd.s32 1, %s27
      %p33 = scmp.ge.s32.totalorder %s32, 1
      %s34 = scalar_select %p33, 0, %s32
      %s35 = sadd.s32 1, %s26
      %s36 = scalar_select %p33, %s35, %s26
      %p37 = scmp.ge.s32.totalorder %s36, 2
      %s38 = scalar_select %p37, 0, %s36
      %p39 = scmp.eq.s32.totalorder %s26, 0
      %s40 = scalar_select %p39, %s27, 0
      %p41 = scmp.eq.s32.totalorder %s38, 0
      %s42 = scalar_select %p41, %s34, 0
      %s43 = ssub.s32 %s40, %s42
      %p44 = scmp.eq.s32.totalorder %s43, 0
      %s46 = sadd.s32 %s45, 1
      %s47 = scalar_select %p44, %s45, %s46
      %p50 = pneg %p44
      %p51 = scmp.eq.s32.totalorder %s19, 1
      %p52 = por %p50, %p51
      %p53 = scmp.ne.s32.totalorder %s45, %s48
      %p54 = scmp.eq.s32.totalorder %s19, 0
      %p55 = por %p53, %p54
      %p56 = scmp.ne.s32.totalorder %s45, %s48
      %p57 = scmp.eq.s32.totalorder %s24, 1
      %p58 = por %p56, %p57
      %p59 = scmp.ne.s32.totalorder %s48, %s49
      %p60 = scmp.eq.s32.totalorder %s24, 0
      %p61 = por %p59, %p60
      %p62 = scmp.ne.s32.totalorder %s48, %s49
      %p63 = scmp.eq.s32.totalorder %s25, 1
      %p64 = por %p62, %p63
      %p66 = scmp.ne.s32.totalorder %s49, %s65
      %p67 = scmp.eq.s32.totalorder %s25, 0
      %p68 = por %p66, %p67
      %s69 = ssub.s32 %s26, %s38
      %p70 = scmp.eq.s32.totalorder %s69, 0
      %s72 = sadd.s32 %s71, 1
      %s73 = scalar_select %p70, %s71, %s72
      %p76 = pneg %p70
      %p77 = scmp.eq.s32.totalorder %s19, 1
      %p78 = por %p76, %p77
      %p79 = scmp.ne.s32.totalorder %s71, %s74
      %p80 = scmp.eq.s32.totalorder %s19, 0
      %p81 = por %p79, %p80
      %p82 = scmp.ne.s32.totalorder %s71, %s74
      %p83 = scmp.eq.s32.totalorder %s24, 1
      %p84 = por %p82, %p83
      %p85 = scmp.ne.s32.totalorder %s74, %s75
      %p86 = scmp.eq.s32.totalorder %s24, 0
      %p87 = por %p85, %p86
      %p88 = scmp.ne.s32.totalorder %s74, %s75
      %p89 = scmp.eq.s32.totalorder %s25, 1
      %p90 = por %p88, %p89
      %p92 = scmp.ne.s32.totalorder %s75, %s91
      %p93 = scmp.eq.s32.totalorder %s25, 0
      %p94 = por %p92, %p93
      %s95 = ssub.s32 %s26, %s38
      %p96 = scmp.eq.s32.totalorder %s95, 0
      %s98 = sadd.s32 %s97, 1
      %s99 = scalar_select %p96, %s97, %s98
      %p102 = pneg %p96
      %p103 = scmp.eq.s32.totalorder %s19, 1
      %p104 = por %p102, %p103
      %p105 = scmp.ne.s32.totalorder %s97, %s100
      %p106 = scmp.eq.s32.totalorder %s19, 0
      %p107 = por %p105, %p106
      %p108 = scmp.ne.s32.totalorder %s97, %s100
      %p109 = scmp.eq.s32.totalorder %s24, 1
      %p110 = por %p108, %p109
      %p111 = scmp.ne.s32.totalorder %s100, %s101
      %p112 = scmp.eq.s32.totalorder %s24, 0
      %p113 = por %p111, %p112
      %p114 = scmp.ne.s32.totalorder %s100, %s101
      %p115 = scmp.eq.s32.totalorder %s25, 1
      %p116 = por %p114, %p115
      %p118 = scmp.ne.s32.totalorder %s101, %s117
      %p119 = scmp.eq.s32.totalorder %s25, 0
      %p120 = por %p118, %p119
      %s122 = sadd.s32 %s121, 1
      %p125 = scmp.eq.s32.totalorder %s19, 1
      %p126 = scmp.ne.s32.totalorder %s121, %s123
      %p127 = scmp.eq.s32.totalorder %s19, 0
      %p128 = por %p126, %p127
      %p129 = scmp.ne.s32.totalorder %s121, %s123
      %p130 = scmp.eq.s32.totalorder %s24, 1
      %p131 = por %p129, %p130
      %p132 = scmp.ne.s32.totalorder %s123, %s124
      %p133 = scmp.eq.s32.totalorder %s24, 0
      %p134 = por %p132, %p133
      %p135 = scmp.ne.s32.totalorder %s123, %s124
      %p136 = scmp.eq.s32.totalorder %s25, 1
      %p137 = por %p135, %p136
      %p139 = scmp.ne.s32.totalorder %s124, %s138
      %p140 = scmp.eq.s32.totalorder %s25, 0
      %p141 = por %p139, %p140
      %s143 = sadd.s32 %s142, 1
      %p146 = scmp.eq.s32.totalorder %s19, 1
      %p147 = scmp.ne.s32.totalorder %s142, %s144
      %p148 = scmp.eq.s32.totalorder %s19, 0
      %p149 = por %p147, %p148
      %p150 = scmp.ne.s32.totalorder %s142, %s144
      %p151 = scmp.eq.s32.totalorder %s24, 1
      %p152 = por %p150, %p151
      %p153 = scmp.ne.s32.totalorder %s144, %s145
      %p154 = scmp.eq.s32.totalorder %s24, 0
      %p155 = por %p153, %p154
      %p156 = scmp.ne.s32.totalorder %s144, %s145
      %p157 = scmp.eq.s32.totalorder %s25, 1
      %p158 = por %p156, %p157
      %p160 = scmp.ne.s32.totalorder %s145, %s159
      %p161 = scmp.eq.s32.totalorder %s25, 0
      %p162 = por %p160, %p161
      %s164 = sadd.s32 %s163, 1
      %p167 = scmp.eq.s32.totalorder %s19, 1
      %p168 = scmp.ne.s32.totalorder %s163, %s165
      %p169 = scmp.eq.s32.totalorder %s19, 0
      %p170 = por %p168, %p169
      %p171 = scmp.ne.s32.totalorder %s163, %s165
      %p172 = scmp.eq.s32.totalorder %s24, 1
      %p173 = por %p171, %p172
      %p174 = scmp.ne.s32.totalorder %s165, %s166
      %p175 = scmp.eq.s32.totalorder %s24, 0
      %p176 = por %p174, %p175
      %p177 = scmp.ne.s32.totalorder %s165, %s166
      %p178 = scmp.eq.s32.totalorder %s25, 1
      %p179 = por %p177, %p178
      %p181 = scmp.ne.s32.totalorder %s166, %s180
      %p182 = scmp.eq.s32.totalorder %s25, 0
      %p183 = por %p181, %p182
      %p184 = scmp.le.s32.totalorder 1, %s19
      %p185 = scmp.lt.s32.totalorder %s19, 3
      %p186 = pnand %p184, %p185
      %p187 = pneg %p186
      // Predicated region
      $region9: #{tpu_custom_call.1} parent=5 // pred_check
        _
      $region10: #{tpu_custom_call.1} parent=5 // pred_check_branch
        %189 = sbr.rel (%p186) target = $region12
      $region11: #{tpu_custom_call.1} parent=5 // pred_region
        %s190 = ssub.s32 %s19, 1
        // Predicated region
        $region13: #{tpu_custom_call.1} parent=11 // pred_check
          %p191 = pneg %p134
        $region14: #{tpu_custom_call.1} parent=11 // pred_check_branch
          %193 = sbr.rel (%p191) target = $region16
        $region15: #{tpu_custom_call.1} parent=11 // pred_region
          %s195 = ssub.s32 1024, 1024
          %196 = vsyncadd [#allocation13], %s195
          %s197 = sshll.u32 [#allocation12], 4
          %s198 = int_to_ptr.vmem [resolvable:$true] %s197
          %203 = dma.hbm_to_vmem [thread:$0]  %s3, 1024, %s198, [#allocation13], 64, 64, 4
        $region16: #{tpu_custom_call.1} parent=11 // pred_fallthru
          _
        // Predicated region
        $region17: #{tpu_custom_call.1} parent=11 // pred_check
          %p204 = pneg %p155
        $region18: #{tpu_custom_call.1} parent=11 // pred_check_branch
          %206 = sbr.rel (%p204) target = $region20
        $region19: #{tpu_custom_call.1} parent=11 // pred_region
          _
        $region20: #{tpu_custom_call.1} parent=11 // pred_fallthru
          _
      $region12: #{tpu_custom_call.1} parent=5 // pred_fallthru
        _
      %p207 = scmp.lt.s32.totalorder %s19, 2
      // Predicated region
      $region21: #{tpu_custom_call.1} parent=5 // pred_check
        %p208 = pneg %p207
      $region22: #{tpu_custom_call.1} parent=5 // pred_check_branch
        %210 = sbr.rel (%p208) target = $region24
      $region23: #{tpu_custom_call.1} parent=5 // pred_region
        // Predicated region
        $region25: #{tpu_custom_call.1} parent=23 // pred_check
          %p211 = pneg %p55
        $region26: #{tpu_custom_call.1} parent=23 // pred_check_branch
          %213 = sbr.rel (%p211) target = $region28
        $region27: #{tpu_custom_call.1} parent=23 // pred_region
          %s214 = sand.u32 %s45, 1
          %s215 = scalar_lea.sflag [#allocation7], %s214
          %s216 = sand.u32 %s45, 1
          %s217 = smul.addr %s216, 64
          %s218 = scalar_lea.vmem [#allocation6], %s217
          %p219 = scmp.eq.s32.totalorder %s26, 0
          %s220 = scalar_select %p219, %s27, 0
          %s221 = smul.u32 8, %s220
          %s223 = ssub.s32 1024, 1024
          %224 = vsyncadd %s215, %s223
          %s225 = smul.addr %s221, 128
          %s226 = scalar_lea.hbm %s0, %s225
          %s227 = sshll.u32 %s218, 4
          %s228 = int_to_ptr.vmem [resolvable:$true] %s227
          %233 = dma.hbm_to_vmem [thread:$0]  %s226, 1024, %s228, %s215, 128, 128, 8
        $region28: #{tpu_custom_call.1} parent=23 // pred_fallthru
          _
        // Predicated region
        $region29: #{tpu_custom_call.1} parent=23 // pred_check
          %p234 = pneg %p81
        $region30: #{tpu_custom_call.1} parent=23 // pred_check_branch
          %236 = sbr.rel (%p234) target = $region32
        $region31: #{tpu_custom_call.1} parent=23 // pred_region
          %s237 = sand.u32 %s19, 1
          %s238 = scalar_lea.sflag [#allocation10], %s237
          %s239 = sand.u32 %s71, 1
          %s240 = smul.addr %s239, 512
          %s241 = scalar_lea.vmem [#allocation9], %s240
          %s243 = ssub.s32 8192, 8192
          %244 = vsyncadd %s238, %s243
          %s245 = smul.addr %s26, 128
          %s246 = smul.addr %s245, 64
          %s247 = scalar_lea.hbm %s1, %s246
          %s248 = sshll.u32 %s241, 4
          %s249 = int_to_ptr.vmem [resolvable:$true] %s248
          %254 = dma.hbm_to_vmem [thread:$0]  %s247, 8192, %s249, %s238, 256, 256, 16
        $region32: #{tpu_custom_call.1} parent=23 // pred_fallthru
          _
        // Predicated region
        $region33: #{tpu_custom_call.1} parent=23 // pred_check
          %p255 = pneg %p107
        $region34: #{tpu_custom_call.1} parent=23 // pred_check_branch
          %257 = sbr.rel (%p255) target = $region36
        $region35: #{tpu_custom_call.1} parent=23 // pred_region
          %s258 = sand.u32 %s19, 1
          %s259 = scalar_lea.sflag [#allocation10], %s258
          %s260 = sand.u32 %s97, 1
          %s261 = smul.addr %s260, 4
          %s262 = scalar_lea.vmem [#allocation11], %s261
          %s264 = ssub.s32 64, 64
          %265 = vsyncadd %s259, %s264
          %s266 = smul.addr %s26, 4
          %s267 = smul.addr %s266, 16
          %s268 = scalar_lea.hbm %s2, %s267
          %s270 = sshll.u32 %s262, 4
          %s271 = int_to_ptr.vmem [resolvable:$true] %s270
          %273 = dma.hbm_to_vmem [thread:$0]  %s268, 64, %s271, %s259
        $region36: #{tpu_custom_call.1} parent=23 // pred_fallthru
          _
      $region24: #{tpu_custom_call.1} parent=5 // pred_fallthru
        _
      %p274 = scmp.le.s32.totalorder 1, %s19
      %p275 = scmp.lt.s32.totalorder %s19, 3
      %p276 = pnand %p274, %p275
      %p277 = pneg %p276
      // Predicated region
      $region37: #{tpu_custom_call.1} parent=5 // pred_check
        _
      $region38: #{tpu_custom_call.1} parent=5 // pred_check_branch
        %279 = sbr.rel (%p276) target = $region40
      $region39: #{tpu_custom_call.1} parent=5 // pred_region
        %s280 = ssub.s32 %s19, 1
        %s281 = sand.u32 %s48, 1
        %s282 = scalar_lea.sflag [#allocation7], %s281
        %s283 = sand.u32 %s48, 1
        %s284 = smul.addr %s283, 64
        %s285 = scalar_lea.vmem [#allocation6], %s284
        // Predicated region
        $region41: #{tpu_custom_call.1} parent=39 // pred_check
          %p286 = pneg %p61
        $region42: #{tpu_custom_call.1} parent=39 // pred_check_branch
          %288 = sbr.rel (%p286) target = $region44
        $region43: #{tpu_custom_call.1} parent=39 // pred_region
          %289 = dma.done %s282, 1024
        $region44: #{tpu_custom_call.1} parent=39 // pred_fallthru
          _
        %s290 = sand.u32 %s24, 1
        %s291 = scalar_lea.sflag [#allocation10], %s290
        %s292 = sand.u32 %s74, 1
        %s293 = smul.addr %s292, 512
        %s294 = scalar_lea.vmem [#allocation9], %s293
        // Predicated region
        $region45: #{tpu_custom_call.1} parent=39 // pred_check
          %p295 = pneg %p87
        $region46: #{tpu_custom_call.1} parent=39 // pred_check_branch
          %297 = sbr.rel (%p295) target = $region48
        $region47: #{tpu_custom_call.1} parent=39 // pred_region
          %298 = dma.done %s291, 8192
        $region48: #{tpu_custom_call.1} parent=39 // pred_fallthru
          _
        %s299 = sand.u32 %s24, 1
        %s300 = scalar_lea.sflag [#allocation10], %s299
        %s301 = sand.u32 %s100, 1
        %s302 = smul.addr %s301, 4
        %s303 = scalar_lea.vmem [#allocation11], %s302
        // Predicated region
        $region49: #{tpu_custom_call.1} parent=39 // pred_check
          %p304 = pneg %p113
        $region50: #{tpu_custom_call.1} parent=39 // pred_check_branch
          %306 = sbr.rel (%p304) target = $region52
        $region51: #{tpu_custom_call.1} parent=39 // pred_region
          %307 = dma.done %s300, 64
        $region52: #{tpu_custom_call.1} parent=39 // pred_fallthru
          _
        // Predicated region
        $region53: #{tpu_custom_call.1} parent=39 // pred_check
          %p308 = pneg %p134
        $region54: #{tpu_custom_call.1} parent=39 // pred_check_branch
          %310 = sbr.rel (%p308) target = $region56
        $region55: #{tpu_custom_call.1} parent=39 // pred_region
          %311 = dma.done [#allocation13], 1024
        $region56: #{tpu_custom_call.1} parent=39 // pred_fallthru
          _
        %s312 = sand.u32 %s48, 1
        %s313 = scalar_lea.sflag [#allocation7], %s312
        %s314 = sand.u32 %s48, 1
        %s315 = smul.addr %s314, 64
        %s316 = scalar_lea.vmem [#allocation6], %s315
        %p317 = pneg %p61
        %p318 = pneg %p58
        %s319 = sand.u32 %s24, 1
        %s320 = scalar_lea.sflag [#allocation10], %s319
        %s321 = sand.u32 %s74, 1
        %s322 = smul.addr %s321, 512
        %s323 = scalar_lea.vmem [#allocation9], %s322
        %p324 = pneg %p87
        %p325 = pneg %p84
        %s326 = sand.u32 %s24, 1
        %s327 = scalar_lea.sflag [#allocation10], %s326
        %s328 = sand.u32 %s100, 1
        %s329 = smul.addr %s328, 4
        %s330 = scalar_lea.vmem [#allocation11], %s329
        %p331 = pneg %p113
        %p332 = pneg %p110
        %p333 = pneg %p134
        %p334 = pneg %p131
        %p335 = pneg %p155
        %p336 = pneg %p152
        %p337 = pneg %p176
        %p338 = pneg %p173
        %p339 = scmp.eq.s32.totalorder %s28, 0
        %s340 = scalar_select %p339, %s29, 0
        %s341 = smul.u32 8, %s340
        %s343 = smul.u32 %s29, 8
        %p344 = scmp.eq.s32.totalorder %s28, 0
        // Predicated region
        $region57: #{tpu_custom_call.1} parent=39 // pred_check
          %p345 = pneg %p344
        $region58: #{tpu_custom_call.1} parent=39 // pred_check_branch
          %347 = sbr.rel (%p345) target = $region60
        $region59: #{tpu_custom_call.1} parent=39 // pred_region
          %v348 = vld [vmem:[%s285] sm:$0xff]
          %v349 = vld [vmem:[%s285 + $0x8] sm:$0xff]
          %v350 = vld [vmem:[%s285 + $0x10] sm:$0xff]
          %v351 = vld [vmem:[%s285 + $0x18] sm:$0xff]
          %v352 = vld [vmem:[%s285 + $0x20] sm:$0xff]
          %v353 = vld [vmem:[%s285 + $0x28] sm:$0xff]
          %v354 = vld [vmem:[%s285 + $0x30] sm:$0xff]
          %v355 = vld [vmem:[%s285 + $0x38] sm:$0xff]
          %s356 = smul.u32 %s343, 8
          %s357 = scalar_lea.vmem [#allocation2], %s356
          %358 = vst [vmem:[%s357] sm:$0xff] %v348
          %359 = vst [vmem:[%s357 + $0x8] sm:$0xff] %v349
          %360 = vst [vmem:[%s357 + $0x10] sm:$0xff] %v350
          %361 = vst [vmem:[%s357 + $0x18] sm:$0xff] %v351
          %362 = vst [vmem:[%s357 + $0x20] sm:$0xff] %v352
          %363 = vst [vmem:[%s357 + $0x28] sm:$0xff] %v353
          %364 = vst [vmem:[%s357 + $0x30] sm:$0xff] %v354
          %365 = vst [vmem:[%s357 + $0x38] sm:$0xff] %v355
        $region60: #{tpu_custom_call.1} parent=39 // pred_fallthru
          _
        %p366 = scmp.eq.s32.totalorder %s29, 0
        // Predicated region
        $region61: #{tpu_custom_call.1} parent=39 // pred_check
          %p367 = pneg %p366
        $region62: #{tpu_custom_call.1} parent=39 // pred_check_branch
          %369 = sbr.rel (%p367) target = $region64
        $region63: #{tpu_custom_call.1} parent=39 // pred_region
          %370 = vst [vmem:[#allocation4] sm:$0xff] 0.0
          %371 = vst [vmem:[#allocation5] sm:$0xff] 0.0
        $region64: #{tpu_custom_call.1} parent=39 // pred_fallthru
          _
        %v372 = vld [vmem:[%s294] sm:$0xff]
        %v373 = vld [vmem:[%s294 + $0x8] sm:$0xff]
        %v374 = vld [vmem:[%s294 + $0x10] sm:$0xff]
        %v375 = vld [vmem:[%s294 + $0x18] sm:$0xff]
        %v376 = vld [vmem:[%s294 + $0x20] sm:$0xff]
        %v377 = vld [vmem:[%s294 + $0x28] sm:$0xff]
        %v378 = vld [vmem:[%s294 + $0x30] sm:$0xff]
        %v379 = vld [vmem:[%s294 + $0x38] sm:$0xff]
        %v380 = vld [vmem:[%s294 + $0x40] sm:$0xff]
        %v381 = vld [vmem:[%s294 + $0x48] sm:$0xff]
        %v382 = vld [vmem:[%s294 + $0x50] sm:$0xff]
        %v383 = vld [vmem:[%s294 + $0x58] sm:$0xff]
        %v384 = vld [vmem:[%s294 + $0x60] sm:$0xff]
        %v385 = vld [vmem:[%s294 + $0x68] sm:$0xff]
        %v386 = vld [vmem:[%s294 + $0x70] sm:$0xff]
        %v387 = vld [vmem:[%s294 + $0x78] sm:$0xff]
        %v388 = vld [vmem:[%s294 + $0x80] sm:$0xff]
        %v389 = vld [vmem:[%s294 + $0x88] sm:$0xff]
        %v390 = vld [vmem:[%s294 + $0x90] sm:$0xff]
        %v391 = vld [vmem:[%s294 + $0x98] sm:$0xff]
        %v392 = vld [vmem:[%s294 + $0xa0] sm:$0xff]
        %v393 = vld [vmem:[%s294 + $0xa8] sm:$0xff]
        %v394 = vld [vmem:[%s294 + $0xb0] sm:$0xff]
        %v395 = vld [vmem:[%s294 + $0xb8] sm:$0xff]
        %v396 = vld [vmem:[%s294 + $0xc0] sm:$0xff]
        %v397 = vld [vmem:[%s294 + $0xc8] sm:$0xff]
        %v398 = vld [vmem:[%s294 + $0xd0] sm:$0xff]
        %v399 = vld [vmem:[%s294 + $0xd8] sm:$0xff]
        %v400 = vld [vmem:[%s294 + $0xe0] sm:$0xff]
        %v401 = vld [vmem:[%s294 + $0xe8] sm:$0xff]
        %v402 = vld [vmem:[%s294 + $0xf0] sm:$0xff]
        %v403 = vld [vmem:[%s294 + $0xf8] sm:$0xff]
        %v404 = vld [vmem:[%s294 + $0x100] sm:$0xff]
        %v405 = vld [vmem:[%s294 + $0x108] sm:$0xff]
        %v406 = vld [vmem:[%s294 + $0x110] sm:$0xff]
        %v407 = vld [vmem:[%s294 + $0x118] sm:$0xff]
        %v408 = vld [vmem:[%s294 + $0x120] sm:$0xff]
        %v409 = vld [vmem:[%s294 + $0x128] sm:$0xff]
        %v410 = vld [vmem:[%s294 + $0x130] sm:$0xff]
        %v411 = vld [vmem:[%s294 + $0x138] sm:$0xff]
        %v412 = vld [vmem:[%s294 + $0x140] sm:$0xff]
        %v413 = vld [vmem:[%s294 + $0x148] sm:$0xff]
        %v414 = vld [vmem:[%s294 + $0x150] sm:$0xff]
        %v415 = vld [vmem:[%s294 + $0x158] sm:$0xff]
        %v416 = vld [vmem:[%s294 + $0x160] sm:$0xff]
        %v417 = vld [vmem:[%s294 + $0x168] sm:$0xff]
        %v418 = vld [vmem:[%s294 + $0x170] sm:$0xff]
        %v419 = vld [vmem:[%s294 + $0x178] sm:$0xff]
        %v420 = vld [vmem:[%s294 + $0x180] sm:$0xff]
        %v421 = vld [vmem:[%s294 + $0x188] sm:$0xff]
        %v422 = vld [vmem:[%s294 + $0x190] sm:$0xff]
        %v423 = vld [vmem:[%s294 + $0x198] sm:$0xff]
        %v424 = vld [vmem:[%s294 + $0x1a0] sm:$0xff]
        %v425 = vld [vmem:[%s294 + $0x1a8] sm:$0xff]
        %v426 = vld [vmem:[%s294 + $0x1b0] sm:$0xff]
        %v427 = vld [vmem:[%s294 + $0x1b8] sm:$0xff]
        %v428 = vld [vmem:[%s294 + $0x1c0] sm:$0xff]
        %v429 = vld [vmem:[%s294 + $0x1c8] sm:$0xff]
        %v430 = vld [vmem:[%s294 + $0x1d0] sm:$0xff]
        %v431 = vld [vmem:[%s294 + $0x1d8] sm:$0xff]
        %v432 = vld [vmem:[%s294 + $0x1e0] sm:$0xff]
        %v433 = vld [vmem:[%s294 + $0x1e8] sm:$0xff]
        %v434 = vld [vmem:[%s294 + $0x1f0] sm:$0xff]
        %v435 = vld [vmem:[%s294 + $0x1f8] sm:$0xff]
        %v436 = vld [vmem:[%s303] sm:$0xf]
        %s437 = smul.u32 %s343, 8
        %s438 = scalar_lea.vmem [#allocation2], %s437
        %v439 = vld [vmem:[%s438] sm:$0xff]
        %v440 = vld [vmem:[%s438 + $0x8] sm:$0xff]
        %v441 = vld [vmem:[%s438 + $0x10] sm:$0xff]
        %v442 = vld [vmem:[%s438 + $0x18] sm:$0xff]
        %v443 = vld [vmem:[%s438 + $0x20] sm:$0xff]
        %v444 = vld [vmem:[%s438 + $0x28] sm:$0xff]
        %v445 = vld [vmem:[%s438 + $0x30] sm:$0xff]
        %v446 = vld [vmem:[%s438 + $0x38] sm:$0xff]
        %v447 = vpack.c.bf16 %v440, %v439
        %v448 = vpack.c.bf16 %v442, %v441
        %v449 = vpack.c.bf16 %v444, %v443
        %v450 = vpack.c.bf16 %v446, %v445
        %v452 = vlaneseq
        %v453 = vshrl.u32 %v452, 7
        %v454 = vsub.s32 0, %v453
        %v455 = vrot.slane %v436, %v454
        %v456 = vlaneseq
        %v457 = vshrl.u32 %v456, 7
        %v458 = vsub.s32 1, %v457
        %v459 = vrot.slane %v436, %v458
        %v460 = vlaneseq
        %v461 = vshrl.u32 %v460, 7
        %v462 = vsub.s32 2, %v461
        %v463 = vrot.slane %v436, %v462
        %v464 = vlaneseq
        %v465 = vshrl.u32 %v464, 7
        %v466 = vsub.s32 3, %v465
        %v467 = vrot.slane %v436, %v466
        %v504 = vunpack.c.l.b16 %v372
        %v505 = vunpack.c.h.b16 %v372
        %v506 = vunpack.c.l.b16 %v373
        %v507 = vunpack.c.h.b16 %v373
        %v508 = vunpack.c.l.b16 %v374
        %v509 = vunpack.c.h.b16 %v374
        %v510 = vunpack.c.l.b16 %v375
        %v511 = vunpack.c.h.b16 %v375
        %v512 = vunpack.c.l.b16 %v376
        %v513 = vunpack.c.h.b16 %v376
        %v514 = vunpack.c.l.b16 %v377
        %v515 = vunpack.c.h.b16 %v377
        %v516 = vunpack.c.l.b16 %v378
        %v517 = vunpack.c.h.b16 %v378
        %v518 = vunpack.c.l.b16 %v379
        %v519 = vunpack.c.h.b16 %v379
        %v520 = vunpack.c.l.b16 %v380
        %v521 = vunpack.c.h.b16 %v380
        %v522 = vunpack.c.l.b16 %v381
        %v523 = vunpack.c.h.b16 %v381
        %v524 = vunpack.c.l.b16 %v382
        %v525 = vunpack.c.h.b16 %v382
        %v526 = vunpack.c.l.b16 %v383
        %v527 = vunpack.c.h.b16 %v383
        %v528 = vunpack.c.l.b16 %v384
        %v529 = vunpack.c.h.b16 %v384
        %v530 = vunpack.c.l.b16 %v385
        %v531 = vunpack.c.h.b16 %v385
        %v532 = vunpack.c.l.b16 %v386
        %v533 = vunpack.c.h.b16 %v386
        %v534 = vunpack.c.l.b16 %v387
        %v535 = vunpack.c.h.b16 %v387
        %v536 = vunpack.c.l.b16 %v388
        %v537 = vunpack.c.h.b16 %v388
        %v538 = vunpack.c.l.b16 %v389
        %v539 = vunpack.c.h.b16 %v389
        %v540 = vunpack.c.l.b16 %v390
        %v541 = vunpack.c.h.b16 %v390
        %v542 = vunpack.c.l.b16 %v391
        %v543 = vunpack.c.h.b16 %v391
        %v544 = vunpack.c.l.b16 %v392
        %v545 = vunpack.c.h.b16 %v392
        %v546 = vunpack.c.l.b16 %v393
        %v547 = vunpack.c.h.b16 %v393
        %v548 = vunpack.c.l.b16 %v394
        %v549 = vunpack.c.h.b16 %v394
        %v550 = vunpack.c.l.b16 %v395
        %v551 = vunpack.c.h.b16 %v395
        %v552 = vunpack.c.l.b16 %v396
        %v553 = vunpack.c.h.b16 %v396
        %v554 = vunpack.c.l.b16 %v397
        %v555 = vunpack.c.h.b16 %v397
        %v556 = vunpack.c.l.b16 %v398
        %v557 = vunpack.c.h.b16 %v398
        %v558 = vunpack.c.l.b16 %v399
        %v559 = vunpack.c.h.b16 %v399
        %v560 = vunpack.c.l.b16 %v400
        %v561 = vunpack.c.h.b16 %v400
        %v562 = vunpack.c.l.b16 %v401
        %v563 = vunpack.c.h.b16 %v401
        %v564 = vunpack.c.l.b16 %v402
        %v565 = vunpack.c.h.b16 %v402
        %v566 = vunpack.c.l.b16 %v403
        %v567 = vunpack.c.h.b16 %v403
        %v568 = vpack.c.b16 %v508, %v504
        %v569 = vpack.c.b16 %v509, %v505
        %v570 = vpack.c.b16 %v510, %v506
        %v571 = vpack.c.b16 %v511, %v507
        %v572 = vpack.c.b16 %v516, %v512
        %v573 = vpack.c.b16 %v517, %v513
        %v574 = vpack.c.b16 %v518, %v514
        %v575 = vpack.c.b16 %v519, %v515
        %v576 = vpack.c.b16 %v524, %v520
        %v577 = vpack.c.b16 %v525, %v521
        %v578 = vpack.c.b16 %v526, %v522
        %v579 = vpack.c.b16 %v527, %v523
        %v580 = vpack.c.b16 %v532, %v528
        %v581 = vpack.c.b16 %v533, %v529
        %v582 = vpack.c.b16 %v534, %v530
        %v583 = vpack.c.b16 %v535, %v531
        %v584 = vpack.c.b16 %v540, %v536
        %v585 = vpack.c.b16 %v541, %v537
        %v586 = vpack.c.b16 %v542, %v538
        %v587 = vpack.c.b16 %v543, %v539
        %v588 = vpack.c.b16 %v548, %v544
        %v589 = vpack.c.b16 %v549, %v545
        %v590 = vpack.c.b16 %v550, %v546
        %v591 = vpack.c.b16 %v551, %v547
        %v592 = vpack.c.b16 %v556, %v552
        %v593 = vpack.c.b16 %v557, %v553
        %v594 = vpack.c.b16 %v558, %v554
        %v595 = vpack.c.b16 %v559, %v555
        %v596 = vpack.c.b16 %v564, %v560
        %v597 = vpack.c.b16 %v565, %v561
        %v598 = vpack.c.b16 %v566, %v562
        %v599 = vpack.c.b16 %v567, %v563
        %632 = vmatprep.subr.bf16.mxu0 %v569
        %633 = vmatpush1.bf16.msra.mxu0 %v568
        %634 = vmatprep.subr.bf16.mxu0 %v573
        %635 = vmatpush1.bf16.msra.mxu0 %v572
        %636 = vmatprep.subr.bf16.mxu0 %v577
        %637 = vmatpush1.bf16.msra.mxu0 %v576
        %638 = vmatprep.subr.bf16.mxu0 %v581
        %639 = vmatpush1.bf16.msra.mxu0 %v580
        %640 = vmatprep.subr.bf16.mxu0 %v585
        %641 = vmatpush1.bf16.msra.mxu0 %v584
        %642 = vmatprep.subr.bf16.mxu0 %v589
        %643 = vmatpush1.bf16.msra.mxu0 %v588
        %644 = vmatprep.subr.bf16.mxu0 %v593
        %645 = vmatpush1.bf16.msra.mxu0 %v592
        %646 = vmatprep.subr.bf16.mxu0 %v597
        %647 = vmatpush1.bf16.msra.mxu0 %v596
        %648 = vmatprep.subr.bf16.mxu0 0
        %649 = vmatpush1.bf16.msra.mxu0 0
        %650 = vmatprep.subr.bf16.mxu0 0
        %651 = vmatpush1.bf16.msra.mxu0 0
        %652 = vmatprep.subr.bf16.mxu0 0
        %653 = vmatpush1.bf16.msra.mxu0 0
        %654 = vmatprep.subr.bf16.mxu0 0
        %655 = vmatpush1.bf16.msra.mxu0 0
        %656 = vmatprep.subr.bf16.mxu0 0
        %657 = vmatpush1.bf16.msra.mxu0 0
        %658 = vmatprep.subr.bf16.mxu0 0
        %659 = vmatpush1.bf16.msra.mxu0 0
        %660 = vmatprep.subr.bf16.mxu0 0
        %661 = vmatpush1.bf16.msra.mxu0 0
        %662 = vmatprep.subr.bf16.mxu0 0
        %663 = vmatpush1.bf16.msra.mxu0 0
        %664 = vmatprep.mubr.bf16.mxu0 0
        %665 = vmatmul.mubr.bf16.gmra.mrb[0].mxu0 %v447
        %v666 = vpop.f32.mrb[0].mxu0
        %v667 = vadd.f32 %v455, %v666
        %v668 = vpop.f32.mrb[0].mxu0
        %v669 = vadd.f32 %v459, %v668
        %v670 = vpop.f32.mrb[0].mxu0
        %v671 = vadd.f32 %v455, %v670
        %v672 = vpop.f32.mrb[0].mxu0
        %v673 = vadd.f32 %v459, %v672
        %674 = vmatprep.mubr.bf16.mxu0 0
        %675 = vmatmul.mubr.bf16.gmra.mrb[0].mxu0 %v448
        %v676 = vpop.f32.mrb[0].mxu0
        %v677 = vadd.f32 %v455, %v676
        %v678 = vpop.f32.mrb[0].mxu0
        %v679 = vadd.f32 %v459, %v678
        %v680 = vpop.f32.mrb[0].mxu0
        %v681 = vadd.f32 %v455, %v680
        %v682 = vpop.f32.mrb[0].mxu0
        %v683 = vadd.f32 %v459, %v682
        %684 = vmatprep.mubr.bf16.mxu0 0
        %685 = vmatmul.mubr.bf16.gmra.mrb[0].mxu0 %v449
        %v686 = vpop.f32.mrb[0].mxu0
        %v687 = vadd.f32 %v455, %v686
        %v688 = vpop.f32.mrb[0].mxu0
        %v689 = vadd.f32 %v459, %v688
        %v690 = vpop.f32.mrb[0].mxu0
        %v691 = vadd.f32 %v455, %v690
        %v692 = vpop.f32.mrb[0].mxu0
        %v693 = vadd.f32 %v459, %v692
        %694 = vmatprep.mubr.bf16.mxu0 0
        %695 = vmatmul.mubr.bf16.gmra.mrb[0].mxu0 %v450
        %v696 = vpop.f32.mrb[0].mxu0
        %v697 = vadd.f32 %v455, %v696
        %v698 = vpop.f32.mrb[0].mxu0
        %v699 = vadd.f32 %v459, %v698
        %v700 = vpop.f32.mrb[0].mxu0
        %v701 = vadd.f32 %v455, %v700
        %v702 = vpop.f32.mrb[0].mxu0
        %v703 = vadd.f32 %v459, %v702
        %704 = vdwg.mxu0
        %705 = vmatprep.subr.bf16.mxu0 %v571
        %706 = vmatpush1.bf16.msra.mxu0 %v570
        %707 = vmatprep.subr.bf16.mxu0 %v575
        %708 = vmatpush1.bf16.msra.mxu0 %v574
        %709 = vmatprep.subr.bf16.mxu0 %v579
        %710 = vmatpush1.bf16.msra.mxu0 %v578
        %711 = vmatprep.subr.bf16.mxu0 %v583
        %712 = vmatpush1.bf16.msra.mxu0 %v582
        %713 = vmatprep.subr.bf16.mxu0 %v587
        %714 = vmatpush1.bf16.msra.mxu0 %v586
        %715 = vmatprep.subr.bf16.mxu0 %v591
        %716 = vmatpush1.bf16.msra.mxu0 %v590
        %717 = vmatprep.subr.bf16.mxu0 %v595
        %718 = vmatpush1.bf16.msra.mxu0 %v594
        %719 = vmatprep.subr.bf16.mxu0 %v599
        %720 = vmatpush1.bf16.msra.mxu0 %v598
        %721 = vmatprep.subr.bf16.mxu0 0
        %722 = vmatpush1.bf16.msra.mxu0 0
        %723 = vmatprep.subr.bf16.mxu0 0
        %724 = vmatpush1.bf16.msra.mxu0 0
        %725 = vmatprep.subr.bf16.mxu0 0
        %726 = vmatpush1.bf16.msra.mxu0 0
        %727 = vmatprep.subr.bf16.mxu0 0
        %728 = vmatpush1.bf16.msra.mxu0 0
        %729 = vmatprep.subr.bf16.mxu0 0
        %730 = vmatpush1.bf16.msra.mxu0 0
        %731 = vmatprep.subr.bf16.mxu0 0
        %732 = vmatpush1.bf16.msra.mxu0 0
        %733 = vmatprep.subr.bf16.mxu0 0
        %734 = vmatpush1.bf16.msra.mxu0 0
        %735 = vmatprep.subr.bf16.mxu0 0
        %736 = vmatpush1.bf16.msra.mxu0 0
        %737 = vmatprep.mubr.bf16.mxu0 0
        %738 = vmatmul.mubr.bf16.gmra.mrb[0].mxu0 %v447
        %v739 = vpop.f32.mrb[0].mxu0
        %v740 = vadd.f32 %v463, %v739
        %v741 = vpop.f32.mrb[0].mxu0
        %v742 = vadd.f32 %v467, %v741
        %v743 = vpop.f32.mrb[0].mxu0
        %v744 = vadd.f32 %v463, %v743
        %v745 = vpop.f32.mrb[0].mxu0
        %v746 = vadd.f32 %v467, %v745
        %747 = vmatprep.mubr.bf16.mxu0 0
        %748 = vmatmul.mubr.bf16.gmra.mrb[0].mxu0 %v448
        %v749 = vpop.f32.mrb[0].mxu0
        %v750 = vadd.f32 %v463, %v749
        %v751 = vpop.f32.mrb[0].mxu0
        %v752 = vadd.f32 %v467, %v751
        %v753 = vpop.f32.mrb[0].mxu0
        %v754 = vadd.f32 %v463, %v753
        %v755 = vpop.f32.mrb[0].mxu0
        %v756 = vadd.f32 %v467, %v755
        %757 = vmatprep.mubr.bf16.mxu0 0
        %758 = vmatmul.mubr.bf16.gmra.mrb[0].mxu0 %v449
        %v759 = vpop.f32.mrb[0].mxu0
        %v760 = vadd.f32 %v463, %v759
        %v761 = vpop.f32.mrb[0].mxu0
        %v762 = vadd.f32 %v467, %v761
        %v763 = vpop.f32.mrb[0].mxu0
        %v764 = vadd.f32 %v463, %v763
        %v765 = vpop.f32.mrb[0].mxu0
        %v766 = vadd.f32 %v467, %v765
        %767 = vmatprep.mubr.bf16.mxu0 0
        %768 = vmatmul.mubr.bf16.gmra.mrb[0].mxu0 %v450
        %v769 = vpop.f32.mrb[0].mxu0
        %v770 = vadd.f32 %v463, %v769
        %v771 = vpop.f32.mrb[0].mxu0
        %v772 = vadd.f32 %v467, %v771
        %v773 = vpop.f32.mrb[0].mxu0
        %v774 = vadd.f32 %v463, %v773
        %v775 = vpop.f32.mrb[0].mxu0
        %v776 = vadd.f32 %v467, %v775
        %777 = vdwg.mxu0
        %778 = vst [vmem:[#allocation3] sm:$0xff] %v667
        %779 = vst [vmem:[#allocation3 + $0x8] sm:$0xff] %v669
        %780 = vst [vmem:[#allocation3 + $0x10] sm:$0xff] %v740
        %781 = vst [vmem:[#allocation3 + $0x18] sm:$0xff] %v742
        %782 = vst [vmem:[#allocation3 + $0x20] sm:$0xff] %v671
        %783 = vst [vmem:[#allocation3 + $0x28] sm:$0xff] %v673
        %784 = vst [vmem:[#allocation3 + $0x30] sm:$0xff] %v744
        %785 = vst [vmem:[#allocation3 + $0x38] sm:$0xff] %v746
        %786 = vst [vmem:[#allocation3 + $0x40] sm:$0xff] %v677
        %787 = vst [vmem:[#allocation3 + $0x48] sm:$0xff] %v679
        %788 = vst [vmem:[#allocation3 + $0x50] sm:$0xff] %v750
        %789 = vst [vmem:[#allocation3 + $0x58] sm:$0xff] %v752
        %790 = vst [vmem:[#allocation3 + $0x60] sm:$0xff] %v681
        %791 = vst [vmem:[#allocation3 + $0x68] sm:$0xff] %v683
        %792 = vst [vmem:[#allocation3 + $0x70] sm:$0xff] %v754
        %793 = vst [vmem:[#allocation3 + $0x78] sm:$0xff] %v756
        %794 = vst [vmem:[#allocation3 + $0x80] sm:$0xff] %v687
        %795 = vst [vmem:[#allocation3 + $0x88] sm:$0xff] %v689
        %796 = vst [vmem:[#allocation3 + $0x90] sm:$0xff] %v760
        %797 = vst [vmem:[#allocation3 + $0x98] sm:$0xff] %v762
        %798 = vst [vmem:[#allocation3 + $0xa0] sm:$0xff] %v691
        %799 = vst [vmem:[#allocation3 + $0xa8] sm:$0xff] %v693
        %800 = vst [vmem:[#allocation3 + $0xb0] sm:$0xff] %v764
        %801 = vst [vmem:[#allocation3 + $0xb8] sm:$0xff] %v766
        %802 = vst [vmem:[#allocation3 + $0xc0] sm:$0xff] %v697
        %803 = vst [vmem:[#allocation3 + $0xc8] sm:$0xff] %v699
        %804 = vst [vmem:[#allocation3 + $0xd0] sm:$0xff] %v770
        %805 = vst [vmem:[#allocation3 + $0xd8] sm:$0xff] %v772
        %806 = vst [vmem:[#allocation3 + $0xe0] sm:$0xff] %v701
        %807 = vst [vmem:[#allocation3 + $0xe8] sm:$0xff] %v703
        %808 = vst [vmem:[#allocation3 + $0xf0] sm:$0xff] %v774
        %809 = vst [vmem:[#allocation3 + $0xf8] sm:$0xff] %v776
        %v810 = vld [vmem:[#allocation4] sm:$0xff]
        %v811 = vld [vmem:[#allocation5] sm:$0xff]
        %v812 = vld [vmem:[#allocation3] sm:$0xff]
        %v813 = vld [vmem:[#allocation3 + $0x8] sm:$0xff]
        %v814 = vld [vmem:[#allocation3 + $0x10] sm:$0xff]
        %v815 = vld [vmem:[#allocation3 + $0x18] sm:$0xff]
        %v816 = vpack.c.bf16 %v810, %v810
        %v849 = vunpack.c.l.b16 %v404
        %v850 = vunpack.c.h.b16 %v404
        %v851 = vunpack.c.l.b16 %v405
        %v852 = vunpack.c.h.b16 %v405
        %v853 = vunpack.c.l.b16 %v406
        %v854 = vunpack.c.h.b16 %v406
        %v855 = vunpack.c.l.b16 %v407
        %v856 = vunpack.c.h.b16 %v407
        %v857 = vunpack.c.l.b16 %v408
        %v858 = vunpack.c.h.b16 %v408
        %v859 = vunpack.c.l.b16 %v409
        %v860 = vunpack.c.h.b16 %v409
        %v861 = vunpack.c.l.b16 %v410
        %v862 = vunpack.c.h.b16 %v410
        %v863 = vunpack.c.l.b16 %v411
        %v864 = vunpack.c.h.b16 %v411
        %v865 = vunpack.c.l.b16 %v412
        %v866 = vunpack.c.h.b16 %v412
        %v867 = vunpack.c.l.b16 %v413
        %v868 = vunpack.c.h.b16 %v413
        %v869 = vunpack.c.l.b16 %v414
        %v870 = vunpack.c.h.b16 %v414
        %v871 = vunpack.c.l.b16 %v415
        %v872 = vunpack.c.h.b16 %v415
        %v873 = vunpack.c.l.b16 %v416
        %v874 = vunpack.c.h.b16 %v416
        %v875 = vunpack.c.l.b16 %v417
        %v876 = vunpack.c.h.b16 %v417
        %v877 = vunpack.c.l.b16 %v418
        %v878 = vunpack.c.h.b16 %v418
        %v879 = vunpack.c.l.b16 %v419
        %v880 = vunpack.c.h.b16 %v419
        %v881 = vunpack.c.l.b16 %v420
        %v882 = vunpack.c.h.b16 %v420
        %v883 = vunpack.c.l.b16 %v421
        %v884 = vunpack.c.h.b16 %v421
        %v885 = vunpack.c.l.b16 %v422
        %v886 = vunpack.c.h.b16 %v422
        %v887 = vunpack.c.l.b16 %v423
        %v888 = vunpack.c.h.b16 %v423
        %v889 = vunpack.c.l.b16 %v424
        %v890 = vunpack.c.h.b16 %v424
        %v891 = vunpack.c.l.b16 %v425
        %v892 = vunpack.c.h.b16 %v425
        %v893 = vunpack.c.l.b16 %v426
        %v894 = vunpack.c.h.b16 %v426
        %v895 = vunpack.c.l.b16 %v427
        %v896 = vunpack.c.h.b16 %v427
        %v897 = vunpack.c.l.b16 %v428
        %v898 = vunpack.c.h.b16 %v428
        %v899 = vunpack.c.l.b16 %v429
        %v900 = vunpack.c.h.b16 %v429
        %v901 = vunpack.c.l.b16 %v430
        %v902 = vunpack.c.h.b16 %v430
        %v903 = vunpack.c.l.b16 %v431
        %v904 = vunpack.c.h.b16 %v431
        %v905 = vunpack.c.l.b16 %v432
        %v906 = vunpack.c.h.b16 %v432
        %v907 = vunpack.c.l.b16 %v433
        %v908 = vunpack.c.h.b16 %v433
        %v909 = vunpack.c.l.b16 %v434
        %v910 = vunpack.c.h.b16 %v434
        %v911 = vunpack.c.l.b16 %v435
        %v912 = vunpack.c.h.b16 %v435
        %v913 = vpack.c.b16 %v853, %v849
        %v914 = vpack.c.b16 %v854, %v850
        %v915 = vpack.c.b16 %v855, %v851
        %v916 = vpack.c.b16 %v856, %v852
        %v917 = vpack.c.b16 %v861, %v857
        %v918 = vpack.c.b16 %v862, %v858
        %v919 = vpack.c.b16 %v863, %v859
        %v920 = vpack.c.b16 %v864, %v860
        %v921 = vpack.c.b16 %v869, %v865
        %v922 = vpack.c.b16 %v870, %v866
        %v923 = vpack.c.b16 %v871, %v867
        %v924 = vpack.c.b16 %v872, %v868
        %v925 = vpack.c.b16 %v877, %v873
        %v926 = vpack.c.b16 %v878, %v874
        %v927 = vpack.c.b16 %v879, %v875
        %v928 = vpack.c.b16 %v880, %v876
        %v929 = vpack.c.b16 %v885, %v881
        %v930 = vpack.c.b16 %v886, %v882
        %v931 = vpack.c.b16 %v887, %v883
        %v932 = vpack.c.b16 %v888, %v884
        %v933 = vpack.c.b16 %v893, %v889
        %v934 = vpack.c.b16 %v894, %v890
        %v935 = vpack.c.b16 %v895, %v891
        %v936 = vpack.c.b16 %v896, %v892
        %v937 = vpack.c.b16 %v901, %v897
        %v938 = vpack.c.b16 %v902, %v898
        %v939 = vpack.c.b16 %v903, %v899
        %v940 = vpack.c.b16 %v904, %v900
        %v941 = vpack.c.b16 %v909, %v905
        %v942 = vpack.c.b16 %v910, %v906
        %v943 = vpack.c.b16 %v911, %v907
        %v944 = vpack.c.b16 %v912, %v908
        %977 = vmatprep.subr.bf16.mxu0 %v914
        %978 = vmatpush1.bf16.msra.mxu0 %v913
        %979 = vmatprep.subr.bf16.mxu0 %v918
        %980 = vmatpush1.bf16.msra.mxu0 %v917
        %981 = vmatprep.subr.bf16.mxu0 %v922
        %982 = vmatpush1.bf16.msra.mxu0 %v921
        %983 = vmatprep.subr.bf16.mxu0 %v926
        %984 = vmatpush1.bf16.msra.mxu0 %v925
        %985 = vmatprep.subr.bf16.mxu0 %v930
        %986 = vmatpush1.bf16.msra.mxu0 %v929
        %987 = vmatprep.subr.bf16.mxu0 %v934
        %988 = vmatpush1.bf16.msra.mxu0 %v933
        %989 = vmatprep.subr.bf16.mxu0 %v938
        %990 = vmatpush1.bf16.msra.mxu0 %v937
        %991 = vmatprep.subr.bf16.mxu0 %v942
        %992 = vmatpush1.bf16.msra.mxu0 %v941
        %993 = vmatprep.subr.bf16.mxu0 0
        %994 = vmatpush1.bf16.msra.mxu0 0
        %995 = vmatprep.subr.bf16.mxu0 0
        %996 = vmatpush1.bf16.msra.mxu0 0
        %997 = vmatprep.subr.bf16.mxu0 0
        %998 = vmatpush1.bf16.msra.mxu0 0
        %999 = vmatprep.subr.bf16.mxu0 0
        %1000 = vmatpush1.bf16.msra.mxu0 0
        %1001 = vmatprep.subr.bf16.mxu0 0
        %1002 = vmatpush1.bf16.msra.mxu0 0
        %1003 = vmatprep.subr.bf16.mxu0 0
        %1004 = vmatpush1.bf16.msra.mxu0 0
        %1005 = vmatprep.subr.bf16.mxu0 0
        %1006 = vmatpush1.bf16.msra.mxu0 0
        %1007 = vmatprep.subr.bf16.mxu0 0
        %1008 = vmatpush1.bf16.msra.mxu0 0
        %1009 = vmatprep.mubr.bf16.mxu0 0
        %1010 = vmatmul.mubr.bf16.gmra.mrb[0].mxu0 %v816
        %v1011 = vpop.f32.mrb[0].mxu0
        %v1012 = vadd.f32 0.0, %v1011
        %v1013 = vpop.f32.mrb[0].mxu0
        %v1014 = vadd.f32 0.0, %v1013
        %v1015 = vpop.f32.mrb[0].mxu0
        %v1016 = vpop.f32.mrb[0].mxu0
        %1017 = vdwg.mxu0
        %1018 = vmatprep.subr.bf16.mxu0 %v916
        %1019 = vmatpush1.bf16.msra.mxu0 %v915
        %1020 = vmatprep.subr.bf16.mxu0 %v920
        %1021 = vmatpush1.bf16.msra.mxu0 %v919
        %1022 = vmatprep.subr.bf16.mxu0 %v924
        %1023 = vmatpush1.bf16.msra.mxu0 %v923
        %1024 = vmatprep.subr.bf16.mxu0 %v928
        %1025 = vmatpush1.bf16.msra.mxu0 %v927
        %1026 = vmatprep.subr.bf16.mxu0 %v932
        %1027 = vmatpush1.bf16.msra.mxu0 %v931
        %1028 = vmatprep.subr.bf16.mxu0 %v936
        %1029 = vmatpush1.bf16.msra.mxu0 %v935
        %1030 = vmatprep.subr.bf16.mxu0 %v940
        %1031 = vmatpush1.bf16.msra.mxu0 %v939
        %1032 = vmatprep.subr.bf16.mxu0 %v944
        %1033 = vmatpush1.bf16.msra.mxu0 %v943
        %1034 = vmatprep.subr.bf16.mxu0 0
        %1035 = vmatpush1.bf16.msra.mxu0 0
        %1036 = vmatprep.subr.bf16.mxu0 0
        %1037 = vmatpush1.bf16.msra.mxu0 0
        %1038 = vmatprep.subr.bf16.mxu0 0
        %1039 = vmatpush1.bf16.msra.mxu0 0
        %1040 = vmatprep.subr.bf16.mxu0 0
        %1041 = vmatpush1.bf16.msra.mxu0 0
        %1042 = vmatprep.subr.bf16.mxu0 0
        %1043 = vmatpush1.bf16.msra.mxu0 0
        %1044 = vmatprep.subr.bf16.mxu0 0
        %1045 = vmatpush1.bf16.msra.mxu0 0
        %1046 = vmatprep.subr.bf16.mxu0 0
        %1047 = vmatpush1.bf16.msra.mxu0 0
        %1048 = vmatprep.subr.bf16.mxu0 0
        %1049 = vmatpush1.bf16.msra.mxu0 0
        %1050 = vmatprep.mubr.bf16.mxu0 0
        %1051 = vmatmul.mubr.bf16.gmra.mrb[0].mxu0 %v816
        %v1052 = vpop.f32.mrb[0].mxu0
        %v1053 = vadd.f32 0.0, %v1052
        %v1054 = vpop.f32.mrb[0].mxu0
        %v1055 = vadd.f32 0.0, %v1054
        %v1056 = vpop.f32.mrb[0].mxu0
        %v1057 = vpop.f32.mrb[0].mxu0
        %1058 = vdwg.mxu0
        %v1059 = vadd.f32 %v812, %v1012
        %v1060 = vadd.f32 %v813, %v1014
        %v1061 = vadd.f32 %v814, %v1053
        %v1062 = vadd.f32 %v815, %v1055
        %v1063 = vmul.f32 %v1059, 0.5
        %v1064 = vtanh.pop %v1063
        %v1065 = vmul.f32 %v1064, 0.5
        %v1066 = vadd.f32 %v1065, 0.5
        %v1067 = vmul.f32 %v1060, 0.5
        %v1068 = vtanh.pop %v1067
        %v1069 = vmul.f32 %v1068, 0.5
        %v1070 = vadd.f32 %v1069, 0.5
        %v1071 = vtanh.pop %v1061
        %v1072 = vmul.f32 %v1062, 0.5
        %v1073 = vtanh.pop %v1072
        %v1074 = vmul.f32 %v1073, 0.5
        %v1075 = vadd.f32 %v1074, 0.5
        %v1076 = vmul.f32 %v1070, %v811
        %v1077 = vmul.f32 %v1066, %v1071
        %v1078 = vadd.f32 %v1076, %v1077
        %v1079 = vtanh.pop %v1078
        %v1080 = vmul.f32 %v1075, %v1079
        %1081 = vst [vmem:[%s438] sm:$0xff] %v1080
        %v1082 = vld [vmem:[#allocation3 + $0x20] sm:$0xff]
        %v1083 = vld [vmem:[#allocation3 + $0x28] sm:$0xff]
        %v1084 = vld [vmem:[#allocation3 + $0x30] sm:$0xff]
        %v1085 = vld [vmem:[#allocation3 + $0x38] sm:$0xff]
        %v1086 = vpack.c.bf16 %v1080, %v1080
        %1087 = vmatprep.subr.bf16.mxu0 %v914
        %1088 = vmatpush1.bf16.msra.mxu0 %v913
        %1089 = vmatprep.subr.bf16.mxu0 %v918
        %1090 = vmatpush1.bf16.msra.mxu0 %v917
        %1091 = vmatprep.subr.bf16.mxu0 %v922
        %1092 = vmatpush1.bf16.msra.mxu0 %v921
        %1093 = vmatprep.subr.bf16.mxu0 %v926
        %1094 = vmatpush1.bf16.msra.mxu0 %v925
        %1095 = vmatprep.subr.bf16.mxu0 %v930
        %1096 = vmatpush1.bf16.msra.mxu0 %v929
        %1097 = vmatprep.subr.bf16.mxu0 %v934
        %1098 = vmatpush1.bf16.msra.mxu0 %v933
        %1099 = vmatprep.subr.bf16.mxu0 %v938
        %1100 = vmatpush1.bf16.msra.mxu0 %v937
        %1101 = vmatprep.subr.bf16.mxu0 %v942
        %1102 = vmatpush1.bf16.msra.mxu0 %v941
        %1103 = vmatprep.subr.bf16.mxu0 0
        %1104 = vmatpush1.bf16.msra.mxu0 0
        %1105 = vmatprep.subr.bf16.mxu0 0
        %1106 = vmatpush1.bf16.msra.mxu0 0
        %1107 = vmatprep.subr.bf16.mxu0 0
        %1108 = vmatpush1.bf16.msra.mxu0 0
        %1109 = vmatprep.subr.bf16.mxu0 0
        %1110 = vmatpush1.bf16.msra.mxu0 0
        %1111 = vmatprep.subr.bf16.mxu0 0
        %1112 = vmatpush1.bf16.msra.mxu0 0
        %1113 = vmatprep.subr.bf16.mxu0 0
        %1114 = vmatpush1.bf16.msra.mxu0 0
        %1115 = vmatprep.subr.bf16.mxu0 0
        %1116 = vmatpush1.bf16.msra.mxu0 0
        %1117 = vmatprep.subr.bf16.mxu0 0
        %1118 = vmatpush1.bf16.msra.mxu0 0
        %1119 = vmatprep.mubr.bf16.mxu0 0
        %1120 = vmatmul.mubr.bf16.gmra.mrb[0].mxu0 %v1086
        %v1121 = vpop.f32.mrb[0].mxu0
        %v1122 = vadd.f32 0.0, %v1121
        %v1123 = vpop.f32.mrb[0].mxu0
        %v1124 = vadd.f32 0.0, %v1123
        %v1125 = vpop.f32.mrb[0].mxu0
        %v1126 = vpop.f32.mrb[0].mxu0
        %1127 = vdwg.mxu0
        %1128 = vmatprep.subr.bf16.mxu0 %v916
        %1129 = vmatpush1.bf16.msra.mxu0 %v915
        %1130 = vmatprep.subr.bf16.mxu0 %v920
        %1131 = vmatpush1.bf16.msra.mxu0 %v919
        %1132 = vmatprep.subr.bf16.mxu0 %v924
        %1133 = vmatpush1.bf16.msra.mxu0 %v923
        %1134 = vmatprep.subr.bf16.mxu0 %v928
        %1135 = vmatpush1.bf16.msra.mxu0 %v927
        %1136 = vmatprep.subr.bf16.mxu0 %v932
        %1137 = vmatpush1.bf16.msra.mxu0 %v931
        %1138 = vmatprep.subr.bf16.mxu0 %v936
        %1139 = vmatpush1.bf16.msra.mxu0 %v935
        %1140 = vmatprep.subr.bf16.mxu0 %v940
        %1141 = vmatpush1.bf16.msra.mxu0 %v939
        %1142 = vmatprep.subr.bf16.mxu0 %v944
        %1143 = vmatpush1.bf16.msra.mxu0 %v943
        %1144 = vmatprep.subr.bf16.mxu0 0
        %1145 = vmatpush1.bf16.msra.mxu0 0
        %1146 = vmatprep.subr.bf16.mxu0 0
        %1147 = vmatpush1.bf16.msra.mxu0 0
        %1148 = vmatprep.subr.bf16.mxu0 0
        %1149 = vmatpush1.bf16.msra.mxu0 0
        %1150 = vmatprep.subr.bf16.mxu0 0
        %1151 = vmatpush1.bf16.msra.mxu0 0
        %1152 = vmatprep.subr.bf16.mxu0 0
        %1153 = vmatpush1.bf16.msra.mxu0 0
        %1154 = vmatprep.subr.bf16.mxu0 0
        %1155 = vmatpush1.bf16.msra.mxu0 0
        %1156 = vmatprep.subr.bf16.mxu0 0
        %1157 = vmatpush1.bf16.msra.mxu0 0
        %1158 = vmatprep.subr.bf16.mxu0 0
        %1159 = vmatpush1.bf16.msra.mxu0 0
        %1160 = vmatprep.mubr.bf16.mxu0 0
        %1161 = vmatmul.mubr.bf16.gmra.mrb[0].mxu0 %v1086
        %v1162 = vpop.f32.mrb[0].mxu0
        %v1163 = vadd.f32 0.0, %v1162
        %v1164 = vpop.f32.mrb[0].mxu0
        %v1165 = vadd.f32 0.0, %v1164
        %v1166 = vpop.f32.mrb[0].mxu0
        %v1167 = vpop.f32.mrb[0].mxu0
        %1168 = vdwg.mxu0
        %v1169 = vadd.f32 %v1082, %v1122
        %v1170 = vadd.f32 %v1083, %v1124
        %v1171 = vadd.f32 %v1084, %v1163
        %v1172 = vadd.f32 %v1085, %v1165
        %v1173 = vmul.f32 %v1169, 0.5
        %v1174 = vtanh.pop %v1173
        %v1175 = vmul.f32 %v1174, 0.5
        %v1176 = vadd.f32 %v1175, 0.5
        %v1177 = vmul.f32 %v1170, 0.5
        %v1178 = vtanh.pop %v1177
        %v1179 = vmul.f32 %v1178, 0.5
        %v1180 = vadd.f32 %v1179, 0.5
        %v1181 = vtanh.pop %v1171
        %v1182 = vmul.f32 %v1172, 0.5
        %v1183 = vtanh.pop %v1182
        %v1184 = vmul.f32 %v1183, 0.5
        %v1185 = vadd.f32 %v1184, 0.5
        %v1186 = vmul.f32 %v1180, %v1078
        %v1187 = vmul.f32 %v1176, %v1181
        %v1188 = vadd.f32 %v1186, %v1187
        %v1189 = vtanh.pop %v1188
        %v1190 = vmul.f32 %v1185, %v1189
        %s1191 = sadd.s32 %s343, 1
        %s1192 = smul.u32 %s1191, 8
        %s1193 = scalar_lea.vmem [#allocation2], %s1192
        %1194 = vst [vmem:[%s1193] sm:$0xff] %v1190
        %v1195 = vld [vmem:[#allocation3 + $0x40] sm:$0xff]
        %v1196 = vld [vmem:[#allocation3 + $0x48] sm:$0xff]
        %v1197 = vld [vmem:[#allocation3 + $0x50] sm:$0xff]
        %v1198 = vld [vmem:[#allocation3 + $0x58] sm:$0xff]
        %v1199 = vpack.c.bf16 %v1190, %v1190
        %1200 = vmatprep.subr.bf16.mxu0 %v914
        %1201 = vmatpush1.bf16.msra.mxu0 %v913
        %1202 = vmatprep.subr.bf16.mxu0 %v918
        %1203 = vmatpush1.bf16.msra.mxu0 %v917
        %1204 = vmatprep.subr.bf16.mxu0 %v922
        %1205 = vmatpush1.bf16.msra.mxu0 %v921
        %1206 = vmatprep.subr.bf16.mxu0 %v926
        %1207 = vmatpush1.bf16.msra.mxu0 %v925
        %1208 = vmatprep.subr.bf16.mxu0 %v930
        %1209 = vmatpush1.bf16.msra.mxu0 %v929
        %1210 = vmatprep.subr.bf16.mxu0 %v934
        %1211 = vmatpush1.bf16.msra.mxu0 %v933
        %1212 = vmatprep.subr.bf16.mxu0 %v938
        %1213 = vmatpush1.bf16.msra.mxu0 %v937
        %1214 = vmatprep.subr.bf16.mxu0 %v942
        %1215 = vmatpush1.bf16.msra.mxu0 %v941
        %1216 = vmatprep.subr.bf16.mxu0 0
        %1217 = vmatpush1.bf16.msra.mxu0 0
        %1218 = vmatprep.subr.bf16.mxu0 0
        %1219 = vmatpush1.bf16.msra.mxu0 0
        %1220 = vmatprep.subr.bf16.mxu0 0
        %1221 = vmatpush1.bf16.msra.mxu0 0
        %1222 = vmatprep.subr.bf16.mxu0 0
        %1223 = vmatpush1.bf16.msra.mxu0 0
        %1224 = vmatprep.subr.bf16.mxu0 0
        %1225 = vmatpush1.bf16.msra.mxu0 0
        %1226 = vmatprep.subr.bf16.mxu0 0
        %1227 = vmatpush1.bf16.msra.mxu0 0
        %1228 = vmatprep.subr.bf16.mxu0 0
        %1229 = vmatpush1.bf16.msra.mxu0 0
        %1230 = vmatprep.subr.bf16.mxu0 0
        %1231 = vmatpush1.bf16.msra.mxu0 0
        %1232 = vmatprep.mubr.bf16.mxu0 0
        %1233 = vmatmul.mubr.bf16.gmra.mrb[0].mxu0 %v1199
        %v1234 = vpop.f32.mrb[0].mxu0
        %v1235 = vadd.f32 0.0, %v1234
        %v1236 = vpop.f32.mrb[0].mxu0
        %v1237 = vadd.f32 0.0, %v1236
        %v1238 = vpop.f32.mrb[0].mxu0
        %v1239 = vpop.f32.mrb[0].mxu0
        %1240 = vdwg.mxu0
        %1241 = vmatprep.subr.bf16.mxu0 %v916
        %1242 = vmatpush1.bf16.msra.mxu0 %v915
        %1243 = vmatprep.subr.bf16.mxu0 %v920
        %1244 = vmatpush1.bf16.msra.mxu0 %v919
        %1245 = vmatprep.subr.bf16.mxu0 %v924
        %1246 = vmatpush1.bf16.msra.mxu0 %v923
        %1247 = vmatprep.subr.bf16.mxu0 %v928
        %1248 = vmatpush1.bf16.msra.mxu0 %v927
        %1249 = vmatprep.subr.bf16.mxu0 %v932
        %1250 = vmatpush1.bf16.msra.mxu0 %v931
        %1251 = vmatprep.subr.bf16.mxu0 %v936
        %1252 = vmatpush1.bf16.msra.mxu0 %v935
        %1253 = vmatprep.subr.bf16.mxu0 %v940
        %1254 = vmatpush1.bf16.msra.mxu0 %v939
        %1255 = vmatprep.subr.bf16.mxu0 %v944
        %1256 = vmatpush1.bf16.msra.mxu0 %v943
        %1257 = vmatprep.subr.bf16.mxu0 0
        %1258 = vmatpush1.bf16.msra.mxu0 0
        %1259 = vmatprep.subr.bf16.mxu0 0
        %1260 = vmatpush1.bf16.msra.mxu0 0
        %1261 = vmatprep.subr.bf16.mxu0 0
        %1262 = vmatpush1.bf16.msra.mxu0 0
        %1263 = vmatprep.subr.bf16.mxu0 0
        %1264 = vmatpush1.bf16.msra.mxu0 0
        %1265 = vmatprep.subr.bf16.mxu0 0
        %1266 = vmatpush1.bf16.msra.mxu0 0
        %1267 = vmatprep.subr.bf16.mxu0 0
        %1268 = vmatpush1.bf16.msra.mxu0 0
        %1269 = vmatprep.subr.bf16.mxu0 0
        %1270 = vmatpush1.bf16.msra.mxu0 0
        %1271 = vmatprep.subr.bf16.mxu0 0
        %1272 = vmatpush1.bf16.msra.mxu0 0
        %1273 = vmatprep.mubr.bf16.mxu0 0
        %1274 = vmatmul.mubr.bf16.gmra.mrb[0].mxu0 %v1199
        %v1275 = vpop.f32.mrb[0].mxu0
        %v1276 = vadd.f32 0.0, %v1275
        %v1277 = vpop.f32.mrb[0].mxu0
        %v1278 = vadd.f32 0.0, %v1277
        %v1279 = vpop.f32.mrb[0].mxu0
        %v1280 = vpop.f32.mrb[0].mxu0
        %1281 = vdwg.mxu0
        %v1282 = vadd.f32 %v1195, %v1235
        %v1283 = vadd.f32 %v1196, %v1237
        %v1284 = vadd.f32 %v1197, %v1276
        %v1285 = vadd.f32 %v1198, %v1278
        %v1286 = vmul.f32 %v1282, 0.5
        %v1287 = vtanh.pop %v1286
        %v1288 = vmul.f32 %v1287, 0.5
        %v1289 = vadd.f32 %v1288, 0.5
        %v1290 = vmul.f32 %v1283, 0.5
        %v1291 = vtanh.pop %v1290
        %v1292 = vmul.f32 %v1291, 0.5
        %v1293 = vadd.f32 %v1292, 0.5
        %v1294 = vtanh.pop %v1284
        %v1295 = vmul.f32 %v1285, 0.5
        %v1296 = vtanh.pop %v1295
        %v1297 = vmul.f32 %v1296, 0.5
        %v1298 = vadd.f32 %v1297, 0.5
        %v1299 = vmul.f32 %v1293, %v1188
        %v1300 = vmul.f32 %v1289, %v1294
        %v1301 = vadd.f32 %v1299, %v1300
        %v1302 = vtanh.pop %v1301
        %v1303 = vmul.f32 %v1298, %v1302
        %s1304 = sadd.s32 %s343, 2
        %s1305 = smul.u32 %s1304, 8
        %s1306 = scalar_lea.vmem [#allocation2], %s1305
        %1307 = vst [vmem:[%s1306] sm:$0xff] %v1303
        %v1308 = vld [vmem:[#allocation3 + $0x60] sm:$0xff]
        %v1309 = vld [vmem:[#allocation3 + $0x68] sm:$0xff]
        %v1310 = vld [vmem:[#allocation3 + $0x70] sm:$0xff]
        %v1311 = vld [vmem:[#allocation3 + $0x78] sm:$0xff]
        %v1312 = vpack.c.bf16 %v1303, %v1303
        %1313 = vmatprep.subr.bf16.mxu0 %v914
        %1314 = vmatpush1.bf16.msra.mxu0 %v913
        %1315 = vmatprep.subr.bf16.mxu0 %v918
        %1316 = vmatpush1.bf16.msra.mxu0 %v917
        %1317 = vmatprep.subr.bf16.mxu0 %v922
        %1318 = vmatpush1.bf16.msra.mxu0 %v921
        %1319 = vmatprep.subr.bf16.mxu0 %v926
        %1320 = vmatpush1.bf16.msra.mxu0 %v925
        %1321 = vmatprep.subr.bf16.mxu0 %v930
        %1322 = vmatpush1.bf16.msra.mxu0 %v929
        %1323 = vmatprep.subr.bf16.mxu0 %v934
        %1324 = vmatpush1.bf16.msra.mxu0 %v933
        %1325 = vmatprep.subr.bf16.mxu0 %v938
        %1326 = vmatpush1.bf16.msra.mxu0 %v937
        %1327 = vmatprep.subr.bf16.mxu0 %v942
        %1328 = vmatpush1.bf16.msra.mxu0 %v941
        %1329 = vmatprep.subr.bf16.mxu0 0
        %1330 = vmatpush1.bf16.msra.mxu0 0
        %1331 = vmatprep.subr.bf16.mxu0 0
        %1332 = vmatpush1.bf16.msra.mxu0 0
        %1333 = vmatprep.subr.bf16.mxu0 0
        %1334 = vmatpush1.bf16.msra.mxu0 0
        %1335 = vmatprep.subr.bf16.mxu0 0
        %1336 = vmatpush1.bf16.msra.mxu0 0
        %1337 = vmatprep.subr.bf16.mxu0 0
        %1338 = vmatpush1.bf16.msra.mxu0 0
        %1339 = vmatprep.subr.bf16.mxu0 0
        %1340 = vmatpush1.bf16.msra.mxu0 0
        %1341 = vmatprep.subr.bf16.mxu0 0
        %1342 = vmatpush1.bf16.msra.mxu0 0
        %1343 = vmatprep.subr.bf16.mxu0 0
        %1344 = vmatpush1.bf16.msra.mxu0 0
        %1345 = vmatprep.mubr.bf16.mxu0 0
        %1346 = vmatmul.mubr.bf16.gmra.mrb[0].mxu0 %v1312
        %v1347 = vpop.f32.mrb[0].mxu0
        %v1348 = vadd.f32 0.0, %v1347
        %v1349 = vpop.f32.mrb[0].mxu0
        %v1350 = vadd.f32 0.0, %v1349
        %v1351 = vpop.f32.mrb[0].mxu0
        %v1352 = vpop.f32.mrb[0].mxu0
        %1353 = vdwg.mxu0
        %1354 = vmatprep.subr.bf16.mxu0 %v916
        %1355 = vmatpush1.bf16.msra.mxu0 %v915
        %1356 = vmatprep.subr.bf16.mxu0 %v920
        %1357 = vmatpush1.bf16.msra.mxu0 %v919
        %1358 = vmatprep.subr.bf16.mxu0 %v924
        %1359 = vmatpush1.bf16.msra.mxu0 %v923
        %1360 = vmatprep.subr.bf16.mxu0 %v928
        %1361 = vmatpush1.bf16.msra.mxu0 %v927
        %1362 = vmatprep.subr.bf16.mxu0 %v932
        %1363 = vmatpush1.bf16.msra.mxu0 %v931
        %1364 = vmatprep.subr.bf16.mxu0 %v936
        %1365 = vmatpush1.bf16.msra.mxu0 %v935
        %1366 = vmatprep.subr.bf16.mxu0 %v940
        %1367 = vmatpush1.bf16.msra.mxu0 %v939
        %1368 = vmatprep.subr.bf16.mxu0 %v944
        %1369 = vmatpush1.bf16.msra.mxu0 %v943
        %1370 = vmatprep.subr.bf16.mxu0 0
        %1371 = vmatpush1.bf16.msra.mxu0 0
        %1372 = vmatprep.subr.bf16.mxu0 0
        %1373 = vmatpush1.bf16.msra.mxu0 0
        %1374 = vmatprep.subr.bf16.mxu0 0
        %1375 = vmatpush1.bf16.msra.mxu0 0
        %1376 = vmatprep.subr.bf16.mxu0 0
        %1377 = vmatpush1.bf16.msra.mxu0 0
        %1378 = vmatprep.subr.bf16.mxu0 0
        %1379 = vmatpush1.bf16.msra.mxu0 0
        %1380 = vmatprep.subr.bf16.mxu0 0
        %1381 = vmatpush1.bf16.msra.mxu0 0
        %1382 = vmatprep.subr.bf16.mxu0 0
        %1383 = vmatpush1.bf16.msra.mxu0 0
        %1384 = vmatprep.subr.bf16.mxu0 0
        %1385 = vmatpush1.bf16.msra.mxu0 0
        %1386 = vmatprep.mubr.bf16.mxu0 0
        %1387 = vmatmul.mubr.bf16.gmra.mrb[0].mxu0 %v1312
        %v1388 = vpop.f32.mrb[0].mxu0
        %v1389 = vadd.f32 0.0, %v1388
        %v1390 = vpop.f32.mrb[0].mxu0
        %v1391 = vadd.f32 0.0, %v1390
        %v1392 = vpop.f32.mrb[0].mxu0
        %v1393 = vpop.f32.mrb[0].mxu0
        %1394 = vdwg.mxu0
        %v1395 = vadd.f32 %v1308, %v1348
        %v1396 = vadd.f32 %v1309, %v1350
        %v1397 = vadd.f32 %v1310, %v1389
        %v1398 = vadd.f32 %v1311, %v1391
        %v1399 = vmul.f32 %v1395, 0.5
        %v1400 = vtanh.pop %v1399
        %v1401 = vmul.f32 %v1400, 0.5
        %v1402 = vadd.f32 %v1401, 0.5
        %v1403 = vmul.f32 %v1396, 0.5
        %v1404 = vtanh.pop %v1403
        %v1405 = vmul.f32 %v1404, 0.5
        %v1406 = vadd.f32 %v1405, 0.5
        %v1407 = vtanh.pop %v1397
        %v1408 = vmul.f32 %v1398, 0.5
        %v1409 = vtanh.pop %v1408
        %v1410 = vmul.f32 %v1409, 0.5
        %v1411 = vadd.f32 %v1410, 0.5
        %v1412 = vmul.f32 %v1406, %v1301
        %v1413 = vmul.f32 %v1402, %v1407
        %v1414 = vadd.f32 %v1412, %v1413
        %v1415 = vtanh.pop %v1414
        %v1416 = vmul.f32 %v1411, %v1415
        %s1417 = sadd.s32 %s343, 3
        %s1418 = smul.u32 %s1417, 8
        %s1419 = scalar_lea.vmem [#allocation2], %s1418
        %1420 = vst [vmem:[%s1419] sm:$0xff] %v1416
        %v1421 = vld [vmem:[#allocation3 + $0x80] sm:$0xff]
        %v1422 = vld [vmem:[#allocation3 + $0x88] sm:$0xff]
        %v1423 = vld [vmem:[#allocation3 + $0x90] sm:$0xff]
        %v1424 = vld [vmem:[#allocation3 + $0x98] sm:$0xff]
        %v1425 = vpack.c.bf16 %v1416, %v1416
        %1426 = vmatprep.subr.bf16.mxu0 %v914
        %1427 = vmatpush1.bf16.msra.mxu0 %v913
        %1428 = vmatprep.subr.bf16.mxu0 %v918
        %1429 = vmatpush1.bf16.msra.mxu0 %v917
        %1430 = vmatprep.subr.bf16.mxu0 %v922
        %1431 = vmatpush1.bf16.msra.mxu0 %v921
        %1432 = vmatprep.subr.bf16.mxu0 %v926
        %1433 = vmatpush1.bf16.msra.mxu0 %v925
        %1434 = vmatprep.subr.bf16.mxu0 %v930
        %1435 = vmatpush1.bf16.msra.mxu0 %v929
        %1436 = vmatprep.subr.bf16.mxu0 %v934
        %1437 = vmatpush1.bf16.msra.mxu0 %v933
        %1438 = vmatprep.subr.bf16.mxu0 %v938
        %1439 = vmatpush1.bf16.msra.mxu0 %v937
        %1440 = vmatprep.subr.bf16.mxu0 %v942
        %1441 = vmatpush1.bf16.msra.mxu0 %v941
        %1442 = vmatprep.subr.bf16.mxu0 0
        %1443 = vmatpush1.bf16.msra.mxu0 0
        %1444 = vmatprep.subr.bf16.mxu0 0
        %1445 = vmatpush1.bf16.msra.mxu0 0
        %1446 = vmatprep.subr.bf16.mxu0 0
        %1447 = vmatpush1.bf16.msra.mxu0 0
        %1448 = vmatprep.subr.bf16.mxu0 0
        %1449 = vmatpush1.bf16.msra.mxu0 0
        %1450 = vmatprep.subr.bf16.mxu0 0
        %1451 = vmatpush1.bf16.msra.mxu0 0
        %1452 = vmatprep.subr.bf16.mxu0 0
        %1453 = vmatpush1.bf16.msra.mxu0 0
        %1454 = vmatprep.subr.bf16.mxu0 0
        %1455 = vmatpush1.bf16.msra.mxu0 0
        %1456 = vmatprep.subr.bf16.mxu0 0
        %1457 = vmatpush1.bf16.msra.mxu0 0
        %1458 = vmatprep.mubr.bf16.mxu0 0
        %1459 = vmatmul.mubr.bf16.gmra.mrb[0].mxu0 %v1425
        %v1460 = vpop.f32.mrb[0].mxu0
        %v1461 = vadd.f32 0.0, %v1460
        %v1462 = vpop.f32.mrb[0].mxu0
        %v1463 = vadd.f32 0.0, %v1462
        %v1464 = vpop.f32.mrb[0].mxu0
        %v1465 = vpop.f32.mrb[0].mxu0
        %1466 = vdwg.mxu0
        %1467 = vmatprep.subr.bf16.mxu0 %v916
        %1468 = vmatpush1.bf16.msra.mxu0 %v915
        %1469 = vmatprep.subr.bf16.mxu0 %v920
        %1470 = vmatpush1.bf16.msra.mxu0 %v919
        %1471 = vmatprep.subr.bf16.mxu0 %v924
        %1472 = vmatpush1.bf16.msra.mxu0 %v923
        %1473 = vmatprep.subr.bf16.mxu0 %v928
        %1474 = vmatpush1.bf16.msra.mxu0 %v927
        %1475 = vmatprep.subr.bf16.mxu0 %v932
        %1476 = vmatpush1.bf16.msra.mxu0 %v931
        %1477 = vmatprep.subr.bf16.mxu0 %v936
        %1478 = vmatpush1.bf16.msra.mxu0 %v935
        %1479 = vmatprep.subr.bf16.mxu0 %v940
        %1480 = vmatpush1.bf16.msra.mxu0 %v939
        %1481 = vmatprep.subr.bf16.mxu0 %v944
        %1482 = vmatpush1.bf16.msra.mxu0 %v943
        %1483 = vmatprep.subr.bf16.mxu0 0
        %1484 = vmatpush1.bf16.msra.mxu0 0
        %1485 = vmatprep.subr.bf16.mxu0 0
        %1486 = vmatpush1.bf16.msra.mxu0 0
        %1487 = vmatprep.subr.bf16.mxu0 0
        %1488 = vmatpush1.bf16.msra.mxu0 0
        %1489 = vmatprep.subr.bf16.mxu0 0
        %1490 = vmatpush1.bf16.msra.mxu0 0
        %1491 = vmatprep.subr.bf16.mxu0 0
        %1492 = vmatpush1.bf16.msra.mxu0 0
        %1493 = vmatprep.subr.bf16.mxu0 0
        %1494 = vmatpush1.bf16.msra.mxu0 0
        %1495 = vmatprep.subr.bf16.mxu0 0
        %1496 = vmatpush1.bf16.msra.mxu0 0
        %1497 = vmatprep.subr.bf16.mxu0 0
        %1498 = vmatpush1.bf16.msra.mxu0 0
        %1499 = vmatprep.mubr.bf16.mxu0 0
        %1500 = vmatmul.mubr.bf16.gmra.mrb[0].mxu0 %v1425
        %v1501 = vpop.f32.mrb[0].mxu0
        %v1502 = vadd.f32 0.0, %v1501
        %v1503 = vpop.f32.mrb[0].mxu0
        %v1504 = vadd.f32 0.0, %v1503
        %v1505 = vpop.f32.mrb[0].mxu0
        %v1506 = vpop.f32.mrb[0].mxu0
        %1507 = vdwg.mxu0
        %v1508 = vadd.f32 %v1421, %v1461
        %v1509 = vadd.f32 %v1422, %v1463
        %v1510 = vadd.f32 %v1423, %v1502
        %v1511 = vadd.f32 %v1424, %v1504
        %v1512 = vmul.f32 %v1508, 0.5
        %v1513 = vtanh.pop %v1512
        %v1514 = vmul.f32 %v1513, 0.5
        %v1515 = vadd.f32 %v1514, 0.5
        %v1516 = vmul.f32 %v1509, 0.5
        %v1517 = vtanh.pop %v1516
        %v1518 = vmul.f32 %v1517, 0.5
        %v1519 = vadd.f32 %v1518, 0.5
        %v1520 = vtanh.pop %v1510
        %v1521 = vmul.f32 %v1511, 0.5
        %v1522 = vtanh.pop %v1521
        %v1523 = vmul.f32 %v1522, 0.5
        %v1524 = vadd.f32 %v1523, 0.5
        %v1525 = vmul.f32 %v1519, %v1414
        %v1526 = vmul.f32 %v1515, %v1520
        %v1527 = vadd.f32 %v1525, %v1526
        %v1528 = vtanh.pop %v1527
        %v1529 = vmul.f32 %v1524, %v1528
        %s1530 = sadd.s32 %s343, 4
        %s1531 = smul.u32 %s1530, 8
        %s1532 = scalar_lea.vmem [#allocation2], %s1531
        %1533 = vst [vmem:[%s1532] sm:$0xff] %v1529
        %v1534 = vld [vmem:[#allocation3 + $0xa0] sm:$0xff]
        %v1535 = vld [vmem:[#allocation3 + $0xa8] sm:$0xff]
        %v1536 = vld [vmem:[#allocation3 + $0xb0] sm:$0xff]
        %v1537 = vld [vmem:[#allocation3 + $0xb8] sm:$0xff]
        %v1538 = vpack.c.bf16 %v1529, %v1529
        %1539 = vmatprep.subr.bf16.mxu0 %v914
        %1540 = vmatpush1.bf16.msra.mxu0 %v913
        %1541 = vmatprep.subr.bf16.mxu0 %v918
        %1542 = vmatpush1.bf16.msra.mxu0 %v917
        %1543 = vmatprep.subr.bf16.mxu0 %v922
        %1544 = vmatpush1.bf16.msra.mxu0 %v921
        %1545 = vmatprep.subr.bf16.mxu0 %v926
        %1546 = vmatpush1.bf16.msra.mxu0 %v925
        %1547 = vmatprep.subr.bf16.mxu0 %v930
        %1548 = vmatpush1.bf16.msra.mxu0 %v929
        %1549 = vmatprep.subr.bf16.mxu0 %v934
        %1550 = vmatpush1.bf16.msra.mxu0 %v933
        %1551 = vmatprep.subr.bf16.mxu0 %v938
        %1552 = vmatpush1.bf16.msra.mxu0 %v937
        %1553 = vmatprep.subr.bf16.mxu0 %v942
        %1554 = vmatpush1.bf16.msra.mxu0 %v941
        %1555 = vmatprep.subr.bf16.mxu0 0
        %1556 = vmatpush1.bf16.msra.mxu0 0
        %1557 = vmatprep.subr.bf16.mxu0 0
        %1558 = vmatpush1.bf16.msra.mxu0 0
        %1559 = vmatprep.subr.bf16.mxu0 0
        %1560 = vmatpush1.bf16.msra.mxu0 0
        %1561 = vmatprep.subr.bf16.mxu0 0
        %1562 = vmatpush1.bf16.msra.mxu0 0
        %1563 = vmatprep.subr.bf16.mxu0 0
        %1564 = vmatpush1.bf16.msra.mxu0 0
        %1565 = vmatprep.subr.bf16.mxu0 0
        %1566 = vmatpush1.bf16.msra.mxu0 0
        %1567 = vmatprep.subr.bf16.mxu0 0
        %1568 = vmatpush1.bf16.msra.mxu0 0
        %1569 = vmatprep.subr.bf16.mxu0 0
        %1570 = vmatpush1.bf16.msra.mxu0 0
        %1571 = vmatprep.mubr.bf16.mxu0 0
        %1572 = vmatmul.mubr.bf16.gmra.mrb[0].mxu0 %v1538
        %v1573 = vpop.f32.mrb[0].mxu0
        %v1574 = vadd.f32 0.0, %v1573
        %v1575 = vpop.f32.mrb[0].mxu0
        %v1576 = vadd.f32 0.0, %v1575
        %v1577 = vpop.f32.mrb[0].mxu0
        %v1578 = vpop.f32.mrb[0].mxu0
        %1579 = vdwg.mxu0
        %1580 = vmatprep.subr.bf16.mxu0 %v916
        %1581 = vmatpush1.bf16.msra.mxu0 %v915
        %1582 = vmatprep.subr.bf16.mxu0 %v920
        %1583 = vmatpush1.bf16.msra.mxu0 %v919
        %1584 = vmatprep.subr.bf16.mxu0 %v924
        %1585 = vmatpush1.bf16.msra.mxu0 %v923
        %1586 = vmatprep.subr.bf16.mxu0 %v928
        %1587 = vmatpush1.bf16.msra.mxu0 %v927
        %1588 = vmatprep.subr.bf16.mxu0 %v932
        %1589 = vmatpush1.bf16.msra.mxu0 %v931
        %1590 = vmatprep.subr.bf16.mxu0 %v936
        %1591 = vmatpush1.bf16.msra.mxu0 %v935
        %1592 = vmatprep.subr.bf16.mxu0 %v940
        %1593 = vmatpush1.bf16.msra.mxu0 %v939
        %1594 = vmatprep.subr.bf16.mxu0 %v944
        %1595 = vmatpush1.bf16.msra.mxu0 %v943
        %1596 = vmatprep.subr.bf16.mxu0 0
        %1597 = vmatpush1.bf16.msra.mxu0 0
        %1598 = vmatprep.subr.bf16.mxu0 0
        %1599 = vmatpush1.bf16.msra.mxu0 0
        %1600 = vmatprep.subr.bf16.mxu0 0
        %1601 = vmatpush1.bf16.msra.mxu0 0
        %1602 = vmatprep.subr.bf16.mxu0 0
        %1603 = vmatpush1.bf16.msra.mxu0 0
        %1604 = vmatprep.subr.bf16.mxu0 0
        %1605 = vmatpush1.bf16.msra.mxu0 0
        %1606 = vmatprep.subr.bf16.mxu0 0
        %1607 = vmatpush1.bf16.msra.mxu0 0
        %1608 = vmatprep.subr.bf16.mxu0 0
        %1609 = vmatpush1.bf16.msra.mxu0 0
        %1610 = vmatprep.subr.bf16.mxu0 0
        %1611 = vmatpush1.bf16.msra.mxu0 0
        %1612 = vmatprep.mubr.bf16.mxu0 0
        %1613 = vmatmul.mubr.bf16.gmra.mrb[0].mxu0 %v1538
        %v1614 = vpop.f32.mrb[0].mxu0
        %v1615 = vadd.f32 0.0, %v1614
        %v1616 = vpop.f32.mrb[0].mxu0
        %v1617 = vadd.f32 0.0, %v1616
        %v1618 = vpop.f32.mrb[0].mxu0
        %v1619 = vpop.f32.mrb[0].mxu0
        %1620 = vdwg.mxu0
        %v1621 = vadd.f32 %v1534, %v1574
        %v1622 = vadd.f32 %v1535, %v1576
        %v1623 = vadd.f32 %v1536, %v1615
        %v1624 = vadd.f32 %v1537, %v1617
        %v1625 = vmul.f32 %v1621, 0.5
        %v1626 = vtanh.pop %v1625
        %v1627 = vmul.f32 %v1626, 0.5
        %v1628 = vadd.f32 %v1627, 0.5
        %v1629 = vmul.f32 %v1622, 0.5
        %v1630 = vtanh.pop %v1629
        %v1631 = vmul.f32 %v1630, 0.5
        %v1632 = vadd.f32 %v1631, 0.5
        %v1633 = vtanh.pop %v1623
        %v1634 = vmul.f32 %v1624, 0.5
        %v1635 = vtanh.pop %v1634
        %v1636 = vmul.f32 %v1635, 0.5
        %v1637 = vadd.f32 %v1636, 0.5
        %v1638 = vmul.f32 %v1632, %v1527
        %v1639 = vmul.f32 %v1628, %v1633
        %v1640 = vadd.f32 %v1638, %v1639
        %v1641 = vtanh.pop %v1640
        %v1642 = vmul.f32 %v1637, %v1641
        %s1643 = sadd.s32 %s343, 5
        %s1644 = smul.u32 %s1643, 8
        %s1645 = scalar_lea.vmem [#allocation2], %s1644
        %1646 = vst [vmem:[%s1645] sm:$0xff] %v1642
        %v1647 = vld [vmem:[#allocation3 + $0xc0] sm:$0xff]
        %v1648 = vld [vmem:[#allocation3 + $0xc8] sm:$0xff]
        %v1649 = vld [vmem:[#allocation3 + $0xd0] sm:$0xff]
        %v1650 = vld [vmem:[#allocation3 + $0xd8] sm:$0xff]
        %v1651 = vpack.c.bf16 %v1642, %v1642
        %1652 = vmatprep.subr.bf16.mxu0 %v914
        %1653 = vmatpush1.bf16.msra.mxu0 %v913
        %1654 = vmatprep.subr.bf16.mxu0 %v918
        %1655 = vmatpush1.bf16.msra.mxu0 %v917
        %1656 = vmatprep.subr.bf16.mxu0 %v922
        %1657 = vmatpush1.bf16.msra.mxu0 %v921
        %1658 = vmatprep.subr.bf16.mxu0 %v926
        %1659 = vmatpush1.bf16.msra.mxu0 %v925
        %1660 = vmatprep.subr.bf16.mxu0 %v930
        %1661 = vmatpush1.bf16.msra.mxu0 %v929
        %1662 = vmatprep.subr.bf16.mxu0 %v934
        %1663 = vmatpush1.bf16.msra.mxu0 %v933
        %1664 = vmatprep.subr.bf16.mxu0 %v938
        %1665 = vmatpush1.bf16.msra.mxu0 %v937
        %1666 = vmatprep.subr.bf16.mxu0 %v942
        %1667 = vmatpush1.bf16.msra.mxu0 %v941
        %1668 = vmatprep.subr.bf16.mxu0 0
        %1669 = vmatpush1.bf16.msra.mxu0 0
        %1670 = vmatprep.subr.bf16.mxu0 0
        %1671 = vmatpush1.bf16.msra.mxu0 0
        %1672 = vmatprep.subr.bf16.mxu0 0
        %1673 = vmatpush1.bf16.msra.mxu0 0
        %1674 = vmatprep.subr.bf16.mxu0 0
        %1675 = vmatpush1.bf16.msra.mxu0 0
        %1676 = vmatprep.subr.bf16.mxu0 0
        %1677 = vmatpush1.bf16.msra.mxu0 0
        %1678 = vmatprep.subr.bf16.mxu0 0
        %1679 = vmatpush1.bf16.msra.mxu0 0
        %1680 = vmatprep.subr.bf16.mxu0 0
        %1681 = vmatpush1.bf16.msra.mxu0 0
        %1682 = vmatprep.subr.bf16.mxu0 0
        %1683 = vmatpush1.bf16.msra.mxu0 0
        %1684 = vmatprep.mubr.bf16.mxu0 0
        %1685 = vmatmul.mubr.bf16.gmra.mrb[0].mxu0 %v1651
        %v1686 = vpop.f32.mrb[0].mxu0
        %v1687 = vadd.f32 0.0, %v1686
        %v1688 = vpop.f32.mrb[0].mxu0
        %v1689 = vadd.f32 0.0, %v1688
        %v1690 = vpop.f32.mrb[0].mxu0
        %v1691 = vpop.f32.mrb[0].mxu0
        %1692 = vdwg.mxu0
        %1693 = vmatprep.subr.bf16.mxu0 %v916
        %1694 = vmatpush1.bf16.msra.mxu0 %v915
        %1695 = vmatprep.subr.bf16.mxu0 %v920
        %1696 = vmatpush1.bf16.msra.mxu0 %v919
        %1697 = vmatprep.subr.bf16.mxu0 %v924
        %1698 = vmatpush1.bf16.msra.mxu0 %v923
        %1699 = vmatprep.subr.bf16.mxu0 %v928
        %1700 = vmatpush1.bf16.msra.mxu0 %v927
        %1701 = vmatprep.subr.bf16.mxu0 %v932
        %1702 = vmatpush1.bf16.msra.mxu0 %v931
        %1703 = vmatprep.subr.bf16.mxu0 %v936
        %1704 = vmatpush1.bf16.msra.mxu0 %v935
        %1705 = vmatprep.subr.bf16.mxu0 %v940
        %1706 = vmatpush1.bf16.msra.mxu0 %v939
        %1707 = vmatprep.subr.bf16.mxu0 %v944
        %1708 = vmatpush1.bf16.msra.mxu0 %v943
        %1709 = vmatprep.subr.bf16.mxu0 0
        %1710 = vmatpush1.bf16.msra.mxu0 0
        %1711 = vmatprep.subr.bf16.mxu0 0
        %1712 = vmatpush1.bf16.msra.mxu0 0
        %1713 = vmatprep.subr.bf16.mxu0 0
        %1714 = vmatpush1.bf16.msra.mxu0 0
        %1715 = vmatprep.subr.bf16.mxu0 0
        %1716 = vmatpush1.bf16.msra.mxu0 0
        %1717 = vmatprep.subr.bf16.mxu0 0
        %1718 = vmatpush1.bf16.msra.mxu0 0
        %1719 = vmatprep.subr.bf16.mxu0 0
        %1720 = vmatpush1.bf16.msra.mxu0 0
        %1721 = vmatprep.subr.bf16.mxu0 0
        %1722 = vmatpush1.bf16.msra.mxu0 0
        %1723 = vmatprep.subr.bf16.mxu0 0
        %1724 = vmatpush1.bf16.msra.mxu0 0
        %1725 = vmatprep.mubr.bf16.mxu0 0
        %1726 = vmatmul.mubr.bf16.gmra.mrb[0].mxu0 %v1651
        %v1727 = vpop.f32.mrb[0].mxu0
        %v1728 = vadd.f32 0.0, %v1727
        %v1729 = vpop.f32.mrb[0].mxu0
        %v1730 = vadd.f32 0.0, %v1729
        %v1731 = vpop.f32.mrb[0].mxu0
        %v1732 = vpop.f32.mrb[0].mxu0
        %1733 = vdwg.mxu0
        %v1734 = vadd.f32 %v1647, %v1687
        %v1735 = vadd.f32 %v1648, %v1689
        %v1736 = vadd.f32 %v1649, %v1728
        %v1737 = vadd.f32 %v1650, %v1730
        %v1738 = vmul.f32 %v1734, 0.5
        %v1739 = vtanh.pop %v1738
        %v1740 = vmul.f32 %v1739, 0.5
        %v1741 = vadd.f32 %v1740, 0.5
        %v1742 = vmul.f32 %v1735, 0.5
        %v1743 = vtanh.pop %v1742
        %v1744 = vmul.f32 %v1743, 0.5
        %v1745 = vadd.f32 %v1744, 0.5
        %v1746 = vtanh.pop %v1736
        %v1747 = vmul.f32 %v1737, 0.5
        %v1748 = vtanh.pop %v1747
        %v1749 = vmul.f32 %v1748, 0.5
        %v1750 = vadd.f32 %v1749, 0.5
        %v1751 = vmul.f32 %v1745, %v1640
        %v1752 = vmul.f32 %v1741, %v1746
        %v1753 = vadd.f32 %v1751, %v1752
        %v1754 = vtanh.pop %v1753
        %v1755 = vmul.f32 %v1750, %v1754
        %s1756 = sadd.s32 %s343, 6
        %s1757 = smul.u32 %s1756, 8
        %s1758 = scalar_lea.vmem [#allocation2], %s1757
        %1759 = vst [vmem:[%s1758] sm:$0xff] %v1755
        %v1760 = vld [vmem:[#allocation3 + $0xe0] sm:$0xff]
        %v1761 = vld [vmem:[#allocation3 + $0xe8] sm:$0xff]
        %v1762 = vld [vmem:[#allocation3 + $0xf0] sm:$0xff]
        %v1763 = vld [vmem:[#allocation3 + $0xf8] sm:$0xff]
        %v1764 = vpack.c.bf16 %v1755, %v1755
        %1765 = vmatprep.subr.bf16.mxu0 %v914
        %1766 = vmatpush1.bf16.msra.mxu0 %v913
        %1767 = vmatprep.subr.bf16.mxu0 %v918
        %1768 = vmatpush1.bf16.msra.mxu0 %v917
        %1769 = vmatprep.subr.bf16.mxu0 %v922
        %1770 = vmatpush1.bf16.msra.mxu0 %v921
        %1771 = vmatprep.subr.bf16.mxu0 %v926
        %1772 = vmatpush1.bf16.msra.mxu0 %v925
        %1773 = vmatprep.subr.bf16.mxu0 %v930
        %1774 = vmatpush1.bf16.msra.mxu0 %v929
        %1775 = vmatprep.subr.bf16.mxu0 %v934
        %1776 = vmatpush1.bf16.msra.mxu0 %v933
        %1777 = vmatprep.subr.bf16.mxu0 %v938
        %1778 = vmatpush1.bf16.msra.mxu0 %v937
        %1779 = vmatprep.subr.bf16.mxu0 %v942
        %1780 = vmatpush1.bf16.msra.mxu0 %v941
        %1781 = vmatprep.subr.bf16.mxu0 0
        %1782 = vmatpush1.bf16.msra.mxu0 0
        %1783 = vmatprep.subr.bf16.mxu0 0
        %1784 = vmatpush1.bf16.msra.mxu0 0
        %1785 = vmatprep.subr.bf16.mxu0 0
        %1786 = vmatpush1.bf16.msra.mxu0 0
        %1787 = vmatprep.subr.bf16.mxu0 0
        %1788 = vmatpush1.bf16.msra.mxu0 0
        %1789 = vmatprep.subr.bf16.mxu0 0
        %1790 = vmatpush1.bf16.msra.mxu0 0
        %1791 = vmatprep.subr.bf16.mxu0 0
        %1792 = vmatpush1.bf16.msra.mxu0 0
        %1793 = vmatprep.subr.bf16.mxu0 0
        %1794 = vmatpush1.bf16.msra.mxu0 0
        %1795 = vmatprep.subr.bf16.mxu0 0
        %1796 = vmatpush1.bf16.msra.mxu0 0
        %1797 = vmatprep.mubr.bf16.mxu0 0
        %1798 = vmatmul.mubr.bf16.gmra.mrb[0].mxu0 %v1764
        %v1799 = vpop.f32.mrb[0].mxu0
        %v1800 = vadd.f32 0.0, %v1799
        %v1801 = vpop.f32.mrb[0].mxu0
        %v1802 = vadd.f32 0.0, %v1801
        %v1803 = vpop.f32.mrb[0].mxu0
        %v1804 = vpop.f32.mrb[0].mxu0
        %1805 = vdwg.mxu0
        %1806 = vmatprep.subr.bf16.mxu0 %v916
        %1807 = vmatpush1.bf16.msra.mxu0 %v915
        %1808 = vmatprep.subr.bf16.mxu0 %v920
        %1809 = vmatpush1.bf16.msra.mxu0 %v919
        %1810 = vmatprep.subr.bf16.mxu0 %v924
        %1811 = vmatpush1.bf16.msra.mxu0 %v923
        %1812 = vmatprep.subr.bf16.mxu0 %v928
        %1813 = vmatpush1.bf16.msra.mxu0 %v927
        %1814 = vmatprep.subr.bf16.mxu0 %v932
        %1815 = vmatpush1.bf16.msra.mxu0 %v931
        %1816 = vmatprep.subr.bf16.mxu0 %v936
        %1817 = vmatpush1.bf16.msra.mxu0 %v935
        %1818 = vmatprep.subr.bf16.mxu0 %v940
        %1819 = vmatpush1.bf16.msra.mxu0 %v939
        %1820 = vmatprep.subr.bf16.mxu0 %v944
        %1821 = vmatpush1.bf16.msra.mxu0 %v943
        %1822 = vmatprep.subr.bf16.mxu0 0
        %1823 = vmatpush1.bf16.msra.mxu0 0
        %1824 = vmatprep.subr.bf16.mxu0 0
        %1825 = vmatpush1.bf16.msra.mxu0 0
        %1826 = vmatprep.subr.bf16.mxu0 0
        %1827 = vmatpush1.bf16.msra.mxu0 0
        %1828 = vmatprep.subr.bf16.mxu0 0
        %1829 = vmatpush1.bf16.msra.mxu0 0
        %1830 = vmatprep.subr.bf16.mxu0 0
        %1831 = vmatpush1.bf16.msra.mxu0 0
        %1832 = vmatprep.subr.bf16.mxu0 0
        %1833 = vmatpush1.bf16.msra.mxu0 0
        %1834 = vmatprep.subr.bf16.mxu0 0
        %1835 = vmatpush1.bf16.msra.mxu0 0
        %1836 = vmatprep.subr.bf16.mxu0 0
        %1837 = vmatpush1.bf16.msra.mxu0 0
        %1838 = vmatprep.mubr.bf16.mxu0 0
        %1839 = vmatmul.mubr.bf16.gmra.mrb[0].mxu0 %v1764
        %v1840 = vpop.f32.mrb[0].mxu0
        %v1841 = vadd.f32 0.0, %v1840
        %v1842 = vpop.f32.mrb[0].mxu0
        %v1843 = vadd.f32 0.0, %v1842
        %v1844 = vpop.f32.mrb[0].mxu0
        %v1845 = vpop.f32.mrb[0].mxu0
        %1846 = vdwg.mxu0
        %v1847 = vadd.f32 %v1760, %v1800
        %v1848 = vadd.f32 %v1761, %v1802
        %v1849 = vadd.f32 %v1762, %v1841
        %v1850 = vadd.f32 %v1763, %v1843
        %v1851 = vmul.f32 %v1847, 0.5
        %v1852 = vtanh.pop %v1851
        %v1853 = vmul.f32 %v1852, 0.5
        %v1854 = vadd.f32 %v1853, 0.5
        %v1855 = vmul.f32 %v1848, 0.5
        %v1856 = vtanh.pop %v1855
        %v1857 = vmul.f32 %v1856, 0.5
        %v1858 = vadd.f32 %v1857, 0.5
        %v1859 = vtanh.pop %v1849
        %v1860 = vmul.f32 %v1850, 0.5
        %v1861 = vtanh.pop %v1860
        %v1862 = vmul.f32 %v1861, 0.5
        %v1863 = vadd.f32 %v1862, 0.5
        %v1864 = vmul.f32 %v1858, %v1753
        %v1865 = vmul.f32 %v1854, %v1859
        %v1866 = vadd.f32 %v1864, %v1865
        %v1867 = vtanh.pop %v1866
        %v1868 = vmul.f32 %v1863, %v1867
        %s1869 = sadd.s32 %s343, 7
        %s1870 = smul.u32 %s1869, 8
        %s1871 = scalar_lea.vmem [#allocation2], %s1870
        %1872 = vst [vmem:[%s1871] sm:$0xff] %v1868
        %1873 = vst [vmem:[#allocation4] sm:$0xff] %v1868
        %1874 = vst [vmem:[#allocation5] sm:$0xff] %v1866
        %p1875 = scmp.eq.s32.totalorder %s28, 1
        %p1876 = pnand %p1875, %p366
        %p1877 = pneg %p1876
        // Predicated region
        $region65: #{tpu_custom_call.1} parent=39 // pred_check
          _
        $region66: #{tpu_custom_call.1} parent=39 // pred_check_branch
          %1879 = sbr.rel (%p1876) target = $region68
        $region67: #{tpu_custom_call.1} parent=39 // pred_region
          %v1880 = vpack.c.bf16 %v1868, %v1868
          %v1881 = vld [vmem:[#allocation12] sm:$0xf]
          %v1882 = vld [vmem:[#allocation12 + $0x4] sm:$0xf]
          %v1883 = vld [vmem:[#allocation12 + $0x8] sm:$0xf]
          %v1884 = vld [vmem:[#allocation12 + $0xc] sm:$0xf]
          %v1885 = vld [vmem:[#allocation12 + $0x10] sm:$0xf]
          %v1886 = vld [vmem:[#allocation12 + $0x14] sm:$0xf]
          %v1887 = vld [vmem:[#allocation12 + $0x18] sm:$0xf]
          %v1888 = vld [vmem:[#allocation12 + $0x1c] sm:$0xf]
          %v1889 = vld [vmem:[#allocation12 + $0x20] sm:$0xf]
          %v1890 = vld [vmem:[#allocation12 + $0x24] sm:$0xf]
          %v1891 = vld [vmem:[#allocation12 + $0x28] sm:$0xf]
          %v1892 = vld [vmem:[#allocation12 + $0x2c] sm:$0xf]
          %v1893 = vld [vmem:[#allocation12 + $0x30] sm:$0xf]
          %v1894 = vld [vmem:[#allocation12 + $0x34] sm:$0xf]
          %v1895 = vld [vmem:[#allocation12 + $0x38] sm:$0xf]
          %v1896 = vld [vmem:[#allocation12 + $0x3c] sm:$0xf]
          %v1897 = vld [vmem:[%s4] sm:$0x1]
          %v1899 = vlaneseq
          %v1900 = vshrl.u32 %v1899, 7
          %v1901 = vsub.s32 0, %v1900
          %v1902 = vrot.slane %v1897, %v1901
          %v1920 = vunpack.c.l.b16 %v1881
          %v1921 = vunpack.c.l.b16 %v1882
          %v1922 = vunpack.c.l.b16 %v1883
          %v1923 = vunpack.c.l.b16 %v1884
          %v1924 = vunpack.c.l.b16 %v1885
          %v1925 = vunpack.c.l.b16 %v1886
          %v1926 = vunpack.c.l.b16 %v1887
          %v1927 = vunpack.c.l.b16 %v1888
          %v1928 = vunpack.c.l.b16 %v1889
          %v1929 = vunpack.c.l.b16 %v1890
          %v1930 = vunpack.c.l.b16 %v1891
          %v1931 = vunpack.c.l.b16 %v1892
          %v1932 = vunpack.c.l.b16 %v1893
          %v1933 = vunpack.c.l.b16 %v1894
          %v1934 = vunpack.c.l.b16 %v1895
          %v1935 = vunpack.c.l.b16 %v1896
          %v1936 = vpack.c.b16 %v1921, %v1920
          %v1937 = vpack.c.b16 %v1923, %v1922
          %v1938 = vpack.c.b16 %v1925, %v1924
          %v1939 = vpack.c.b16 %v1927, %v1926
          %v1940 = vpack.c.b16 %v1929, %v1928
          %v1941 = vpack.c.b16 %v1931, %v1930
          %v1942 = vpack.c.b16 %v1933, %v1932
          %v1943 = vpack.c.b16 %v1935, %v1934
          %1952 = vmatprep.subr.bf16.mxu0 0
          %1953 = vmatpush1.bf16.msra.mxu0 %v1936
          %1954 = vmatprep.subr.bf16.mxu0 0
          %1955 = vmatpush1.bf16.msra.mxu0 %v1937
          %1956 = vmatprep.subr.bf16.mxu0 0
          %1957 = vmatpush1.bf16.msra.mxu0 %v1938
          %1958 = vmatprep.subr.bf16.mxu0 0
          %1959 = vmatpush1.bf16.msra.mxu0 %v1939
          %1960 = vmatprep.subr.bf16.mxu0 0
          %1961 = vmatpush1.bf16.msra.mxu0 %v1940
          %1962 = vmatprep.subr.bf16.mxu0 0
          %1963 = vmatpush1.bf16.msra.mxu0 %v1941
          %1964 = vmatprep.subr.bf16.mxu0 0
          %1965 = vmatpush1.bf16.msra.mxu0 %v1942
          %1966 = vmatprep.subr.bf16.mxu0 0
          %1967 = vmatpush1.bf16.msra.mxu0 %v1943
          %1968 = vmatprep.subr.bf16.mxu0 0
          %1969 = vmatpush1.bf16.msra.mxu0 0
          %1970 = vmatprep.subr.bf16.mxu0 0
          %1971 = vmatpush1.bf16.msra.mxu0 0
          %1972 = vmatprep.subr.bf16.mxu0 0
          %1973 = vmatpush1.bf16.msra.mxu0 0
          %1974 = vmatprep.subr.bf16.mxu0 0
          %1975 = vmatpush1.bf16.msra.mxu0 0
          %1976 = vmatprep.subr.bf16.mxu0 0
          %1977 = vmatpush1.bf16.msra.mxu0 0
          %1978 = vmatprep.subr.bf16.mxu0 0
          %1979 = vmatpush1.bf16.msra.mxu0 0
          %1980 = vmatprep.subr.bf16.mxu0 0
          %1981 = vmatpush1.bf16.msra.mxu0 0
          %1982 = vmatprep.subr.bf16.mxu0 0
          %1983 = vmatpush1.bf16.msra.mxu0 0
          %1984 = vmatprep.mubr.bf16.mxu0 0
          %1985 = vmatmul.mubr.bf16.gmra.mrb[0].mxu0 %v1880
          %v1986 = vpop.f32.mrb[0].mxu0
          %v1987 = vadd.f32 %v1902, %v1986
          %v1988 = vpop.f32.mrb[0].mxu0
          %v1989 = vpop.f32.mrb[0].mxu0
          %v1990 = vpop.f32.mrb[0].mxu0
          %1991 = vdwg.mxu0
          %1992 = vst [vmem:[#allocation14] sm:$0xff] %v1987
        $region68: #{tpu_custom_call.1} parent=39 // pred_fallthru
          _
        // Predicated region
        $region69: #{tpu_custom_call.1} parent=39 // pred_check
          %p1993 = pneg %p173
        $region70: #{tpu_custom_call.1} parent=39 // pred_check_branch
          %1995 = sbr.rel (%p1993) target = $region72
        $region71: #{tpu_custom_call.1} parent=39 // pred_region
          %s1997 = ssub.s32 128, 128
          %1998 = vsyncadd [#allocation8], %s1997
          %s2000 = sshll.u32 [#allocation14], 4
          %s2001 = int_to_ptr.vmem [resolvable:$true] %s2000
          %2003 = dma.vmem_to_hbm [thread:$0]  %s2001, 128, %s5, [#allocation8]
        $region72: #{tpu_custom_call.1} parent=39 // pred_fallthru
          _
        // Predicated region
        $region73: #{tpu_custom_call.1} parent=39 // pred_check
          %p2004 = pneg %p173
        $region74: #{tpu_custom_call.1} parent=39 // pred_check_branch
          %2006 = sbr.rel (%p2004) target = $region76
        $region75: #{tpu_custom_call.1} parent=39 // pred_region
          %2007 = dma.done [#allocation8], 128
        $region76: #{tpu_custom_call.1} parent=39 // pred_fallthru
          _
      $region40: #{tpu_custom_call.1} parent=5 // pred_fallthru
        _
      %p2008 = scmp.le.s32.totalorder 2, %s19
      // Predicated region
      $region77: #{tpu_custom_call.1} parent=5 // pred_check
        %p2009 = pneg %p2008
      $region78: #{tpu_custom_call.1} parent=5 // pred_check_branch
        %2011 = sbr.rel (%p2009) target = $region80
      $region79: #{tpu_custom_call.1} parent=5 // pred_region
        %s2012 = ssub.s32 %s19, 2
      $region80: #{tpu_custom_call.1} parent=5 // pred_fallthru
        _
    $region6: #{tpu_custom_call.1} parent=1 // loop_footer
      %s23 = sadd.s32 1, %s19
    $region7: #{tpu_custom_call.1} parent=1 // loop_footer_branch
      %18 = sbr.rel target = $region3
    $region8: #{tpu_custom_call.1} parent=1 // loop_exit
      _
    %2013 = vsyncpa [#allocation7], 1
    %s2014 = scalar_lea.sflag [#allocation7], 1
    %2015 = vsyncpa %s2014, 1
    %2016 = vsyncpa [#allocation10], 1
    %s2017 = scalar_lea.sflag [#allocation10], 1
    %2018 = vsyncpa %s2017, 1
    %2019 = vsyncpa [#allocation13], 1
    %2020 = vsyncpa [#allocation8], 1
    %s2021 = scalar_lea.sflag [#allocation8], 1
    %2022 = vsyncpa %s2021, 1

</llo_original>
